<compile_context>
chip_gen: v5e
topology: v5e:2x2
jax: 0.10.0
libtpu: 0.0.40
codegen_flags: <defaults>
</compile_context>

<pallas_src>
import jax
import jax.numpy as jnp
from jax.experimental import pallas as pl
from jax.experimental.pallas import tpu as pltpu

D_IN = 784
N_MID = 8            # layers 1..8 (all fit inside a zero-padded 128x128 slab)

# (fan_in, fan_out) for the 10 Linear layers: 5 encoder + 5 decoder.
LAYER_DIMS = [
    (784, 128), (128, 64), (64, 36), (36, 18), (18, 9),      # encoder
    (9, 18), (18, 36), (36, 64), (64, 128), (128, 784),      # decoder
]
MID_DIMS = LAYER_DIMS[1:9]
# Activation AFTER each Linear (matches the PyTorch Sequential exactly:
# no ReLU after Linear(18,9) bottleneck, none after Linear(64,128), Sigmoid last).
ACTS = ["relu", "relu", "relu", "relu", "none",
        "relu", "relu", "relu", "none", "sigmoid"]


def _round_up(x, m):
    return ((x + m - 1) // m) * m


# ---------------------------------------------------------------------------
# Kernel: one batch tile -> full 10-layer forward pass, all weights VMEM-resident.
# ---------------------------------------------------------------------------
def autoencoder_kernel(x_ref, w0_ref, wmid_ref, w9_ref, b_ref, out_ref):
    # Layer 0: (tb, 784) @ (784, 128), bf16 MXU inputs, f32 accumulation.
    h = jnp.dot(x_ref[...].astype(jnp.bfloat16), w0_ref[...],
                preferred_element_type=jnp.float32)
    h = jnp.maximum(h + b_ref[0:1, :128], 0.0)

    # Layers 1..8: full (128,128) zero-padded slab per layer. Padded columns
    # stay exactly 0 (zero weight cols + zero bias + ReLU/none), so this is
    # bit-identical to the sub-sliced version but lane-dense every iteration.
    for j in range(N_MID):
        h = jnp.dot(h.astype(jnp.bfloat16), wmid_ref[j],
                    preferred_element_type=jnp.float32)
        h = h + b_ref[j + 1:j + 2, :128]
        if ACTS[j + 1] == "relu":
            h = jnp.maximum(h, 0.0)
        # layers 4 (bottleneck) and 8 have no activation.

    # Layer 9: (tb, 128) @ (128, 784) + bias + sigmoid, stored as bf16.
    h = jnp.dot(h.astype(jnp.bfloat16), w9_ref[...],
                preferred_element_type=jnp.float32)
    h = h + b_ref[9:10, :]
    out_ref[...] = jax.nn.sigmoid(h).astype(out_ref.dtype)


# ---------------------------------------------------------------------------
# Parameter init / packing.
# ---------------------------------------------------------------------------
def init_params(key):
    """PyTorch-style U(-1/sqrt(fan_in), 1/sqrt(fan_in)); W stored as (in, out)."""
    params = []
    for fan_in, fan_out in LAYER_DIMS:
        key, kw, kb = jax.random.split(key, 3)
        bound = 1.0 / (fan_in ** 0.5)
        w = jax.random.uniform(kw, (fan_in, fan_out), jnp.float32, -bound, bound)
        b = jax.random.uniform(kb, (fan_out,), jnp.float32, -bound, bound)
        params += [w, b]
    return params


def pack_params(params):
    """Consolidate 20 tiny tensors into 4 DMA-friendly arrays (bf16 weights)."""
    # W0: (784, 128) bf16 — no feature padding needed anymore.
    w0 = params[0].astype(jnp.bfloat16)
    # Mid weights: one (8, 128, 128) bf16 slab, each layer zero-padded in [j].
    wmid = jnp.zeros((N_MID, 128, 128), jnp.bfloat16)
    for j, (fi, fo) in enumerate(MID_DIMS):
        wmid = wmid.at[j, :fi, :fo].set(params[2 * (j + 1)].astype(jnp.bfloat16))
    # W9: (128, 784) bf16.
    w9 = params[18].astype(jnp.bfloat16)
    # All 10 biases in one f32 (16, 784) buffer (bias add stays f32 on the VPU).
    biases = jnp.zeros((16, D_IN), jnp.float32)
    for i, (_, fo) in enumerate(LAYER_DIMS):
        biases = biases.at[i, :fo].set(params[2 * i + 1])
    return w0, wmid, w9, biases


# ---------------------------------------------------------------------------
# Wrapper: batch-tiled pallas_call with VMEM-resident parameters.
# ---------------------------------------------------------------------------
def _choose_batch_tile(batch, batch_tile):
    full = _round_up(batch, 8)
    tb = max(8, (min(batch_tile, full) // 8) * 8)
    # Prefer >= 2 grid steps so the "parallel" batch axis can shard across the
    # two TensorCores on v7x (no-op on v5e/v6e).
    if tb >= full and full >= 16:
        tb = _round_up((full + 1) // 2, 8)
    return tb


def auto_encoder_forward(x, packed_params, batch_tile=512):
    w0, wmid, w9, biases = packed_params
    batch = x.shape[0]

    tb = _choose_batch_tile(batch, batch_tile)
    padded_b = _round_up(batch, tb)
    grid = (padded_b // tb,)

    # Only pad the batch dim (and only when needed); no feature padding.
    x_in = x if padded_b == batch else jnp.pad(x, ((0, padded_b - batch), (0, 0)))

    out = pl.pallas_call(
        autoencoder_kernel,
        out_shape=jax.ShapeDtypeStruct((padded_b, D_IN), jnp.bfloat16),
        grid_spec=pltpu.PrefetchScalarGridSpec(
            num_scalar_prefetch=0,
            grid=grid,
            in_specs=[
                # Streaming batch tile of activations (full-extent 784 last dim).
                pl.BlockSpec((tb, D_IN), lambda i: (i, 0)),
                # Parameters: constant block index -> fetched once, VMEM-resident.
                # TODO(synk): pipeline_mode=pl.Buffered(1) on these four specs would
                # drop the redundant double-buffer (~0.7 MB) if tb is ever pushed
                # to the scoped-VMEM ceiling.
                pl.BlockSpec((D_IN, 128), lambda i: (0, 0)),
                pl.BlockSpec((N_MID, 128, 128), lambda i: (0, 0, 0)),
                pl.BlockSpec((128, D_IN), lambda i: (0, 0)),
                pl.BlockSpec((16, D_IN), lambda i: (0, 0)),
            ],
            out_specs=pl.BlockSpec((tb, D_IN), lambda i: (i, 0)),
        ),
        compiler_params=pltpu.CompilerParams(
            # Batch tiles are independent -> megacore sharding on v7x.
            dimension_semantics=("parallel",),
            # Raise v5e's 16 MiB scoped default so large batch tiles still
            # double-buffer; matches the v6e/v7x default (safe everywhere).
            vmem_limit_bytes=32 * 1024 * 1024,
        ),
    )(x_in, w0, wmid, w9, biases)

    return out if padded_b == batch else out[:batch]


# ---------------------------------------------------------------------------
# Pure-JAX references.
# ---------------------------------------------------------------------------
def reference_forward(x, params, use_bf16):
    h = x.astype(jnp.float32)
    for i, act in enumerate(ACTS):
        w, b = params[2 * i], params[2 * i + 1]
        if use_bf16:
            h = jnp.dot(h.astype(jnp.bfloat16), w.astype(jnp.bfloat16),
                        preferred_element_type=jnp.float32) + b
        else:
            h = jnp.dot(h, w, preferred_element_type=jnp.float32) + b
        if act == "relu":
            h = jnp.maximum(h, 0.0)
        elif act == "sigmoid":
            h = jax.nn.sigmoid(h)
    return h


if __name__ == "__main__":
    key = jax.random.PRNGKey(0)
    key, kx, kp = jax.random.split(key, 3)

    batch = 64
    x = jax.random.uniform(kx, (batch, 784), jnp.float32)  # flattened 28x28 images
    params = init_params(kp)
    packed = pack_params(params)

    # With batch=64 the tile chooser picks tb=32 -> a 2-step "parallel" grid.
    out = auto_encoder_forward(x, packed)
    out = jax.block_until_ready(out)
    assert out.shape == (batch, 784)
    assert out.dtype == jnp.bfloat16

    out_f32 = out.astype(jnp.float32)

    # Check 1: against a bf16-matmul / f32-accumulation reference (same numerics;
    # tolerance covers the bf16 quantization of the output store).
    ref_bf16 = reference_forward(x, params, use_bf16=True)
    err_bf16 = float(jnp.max(jnp.abs(out_f32 - ref_bf16)))
    assert err_bf16 < 2e-2, f"bf16-reference mismatch: max abs err {err_bf16}"

    # Check 2 (sanity): against the full-f32 PyTorch-equivalent forward.
    # NOTE: weights are intentionally kept in bf16 on the MXU (agreed tradeoff),
    # so this is a loose sanity bound, not bit-faithfulness.
    ref_f32 = reference_forward(x, params, use_bf16=False)
    err_f32 = float(jnp.max(jnp.abs(out_f32 - ref_f32)))
    assert err_f32 < 0.2, f"f32-reference sanity check failed: max abs err {err_f32}"

    print("KERNEL_OK")
</pallas_src>

<mosaic_0001>
module attributes {stable_mosaic.version = 11 : i64} {
  func.func @autoencoder_kernel(%arg0: i32, %arg1: memref<32x784xf32, #tpu.memory_space<vmem>>, %arg2: memref<784x128xbf16, #tpu.memory_space<vmem>>, %arg3: memref<8x128x128xbf16, #tpu.memory_space<vmem>>, %arg4: memref<128x784xbf16, #tpu.memory_space<vmem>>, %arg5: memref<16x784xf32, #tpu.memory_space<vmem>>, %arg6: memref<32x784xbf16, #tpu.memory_space<vmem>>) attributes {dimension_semantics = [#tpu.dimension_semantics<parallel>], iteration_bounds = array<i64: 2>, scalar_prefetch = 0 : i64, scratch_operands = 0 : i64, tpu.core_type = #tpu.core_type<tc>, window_params = [{transform_indices = @transform_0, window_bounds = array<i64: 32, 784>}, {pipeline_mode = #tpu.pipeline_mode<synchronous>, transform_indices = @transform_1, window_bounds = array<i64: 784, 128>}, {pipeline_mode = #tpu.pipeline_mode<synchronous>, transform_indices = @transform_2, window_bounds = array<i64: 8, 128, 128>}, {pipeline_mode = #tpu.pipeline_mode<synchronous>, transform_indices = @transform_3, window_bounds = array<i64: 128, 784>}, {pipeline_mode = #tpu.pipeline_mode<synchronous>, transform_indices = @transform_4, window_bounds = array<i64: 16, 784>}, {transform_indices = @transform_5, window_bounds = array<i64: 32, 784>}]} {
    %c0 = arith.constant 0 : index
    %c0_0 = arith.constant 0 : index
    %0 = vector.load %arg1[%c0, %c0_0] : memref<32x784xf32, #tpu.memory_space<vmem>>, vector<32x784xf32>
    %1 = arith.truncf %0 : vector<32x784xf32> to vector<32x784xbf16>
    %c0_1 = arith.constant 0 : index
    %c0_2 = arith.constant 0 : index
    %2 = vector.load %arg2[%c0_1, %c0_2] : memref<784x128xbf16, #tpu.memory_space<vmem>>, vector<784x128xbf16>
    %cst = arith.constant dense<0.000000e+00> : vector<32x128xf32>
    %3 = tpu.matmul %1, %2, %cst {dimension_numbers = #tpu.dot_dimension_numbers<[1], [0], [0], [1], [0, 0, 1, 1], [], []>} : vector<32x784xbf16>, vector<784x128xbf16>, vector<32x128xf32> -> vector<32x128xf32>
    %c0_3 = arith.constant 0 : index
    %c0_4 = arith.constant 0 : index
    %4 = vector.load %arg5[%c0_3, %c0_4] : memref<16x784xf32, #tpu.memory_space<vmem>>, vector<1x128xf32>
    %5 = vector.broadcast %4 : vector<1x128xf32> to vector<32x128xf32>
    %6 = arith.addf %3, %5 : vector<32x128xf32>
    %cst_5 = arith.constant 0.000000e+00 : f32
    %7 = vector.broadcast %cst_5 : f32 to vector<32x128xf32>
    %8 = arith.maximumf %6, %7 : vector<32x128xf32>
    %9 = arith.truncf %8 : vector<32x128xf32> to vector<32x128xbf16>
    %c0_6 = arith.constant 0 : index
    %c0_7 = arith.constant 0 : index
    %c0_8 = arith.constant 0 : index
    %10 = vector.load %arg3[%c0_6, %c0_7, %c0_8] : memref<8x128x128xbf16, #tpu.memory_space<vmem>>, vector<1x128x128xbf16>
    %11 = vector.shape_cast %10 : vector<1x128x128xbf16> to vector<128x128xbf16>
    %cst_9 = arith.constant dense<0.000000e+00> : vector<32x128xf32>
    %12 = tpu.matmul %9, %11, %cst_9 {dimension_numbers = #tpu.dot_dimension_numbers<[1], [0], [0], [1], [0, 0, 1, 1], [], []>} : vector<32x128xbf16>, vector<128x128xbf16>, vector<32x128xf32> -> vector<32x128xf32>
    %c1 = arith.constant 1 : index
    %c0_10 = arith.constant 0 : index
    %13 = vector.load %arg5[%c1, %c0_10] : memref<16x784xf32, #tpu.memory_space<vmem>>, vector<1x128xf32>
    %14 = vector.broadcast %13 : vector<1x128xf32> to vector<32x128xf32>
    %15 = arith.addf %12, %14 : vector<32x128xf32>
    %cst_11 = arith.constant 0.000000e+00 : f32
    %16 = vector.broadcast %cst_11 : f32 to vector<32x128xf32>
    %17 = arith.maximumf %15, %16 : vector<32x128xf32>
    %18 = arith.truncf %17 : vector<32x128xf32> to vector<32x128xbf16>
    %c1_12 = arith.constant 1 : index
    %c0_13 = arith.constant 0 : index
    %c0_14 = arith.constant 0 : index
    %19 = vector.load %arg3[%c1_12, %c0_13, %c0_14] : memref<8x128x128xbf16, #tpu.memory_space<vmem>>, vector<1x128x128xbf16>
    %20 = vector.shape_cast %19 : vector<1x128x128xbf16> to vector<128x128xbf16>
    %cst_15 = arith.constant dense<0.000000e+00> : vector<32x128xf32>
    %21 = tpu.matmul %18, %20, %cst_15 {dimension_numbers = #tpu.dot_dimension_numbers<[1], [0], [0], [1], [0, 0, 1, 1], [], []>} : vector<32x128xbf16>, vector<128x128xbf16>, vector<32x128xf32> -> vector<32x128xf32>
    %c2 = arith.constant 2 : index
    %c0_16 = arith.constant 0 : index
    %22 = vector.load %arg5[%c2, %c0_16] : memref<16x784xf32, #tpu.memory_space<vmem>>, vector<1x128xf32>
    %23 = vector.broadcast %22 : vector<1x128xf32> to vector<32x128xf32>
    %24 = arith.addf %21, %23 : vector<32x128xf32>
    %cst_17 = arith.constant 0.000000e+00 : f32
    %25 = vector.broadcast %cst_17 : f32 to vector<32x128xf32>
    %26 = arith.maximumf %24, %25 : vector<32x128xf32>
    %27 = arith.truncf %26 : vector<32x128xf32> to vector<32x128xbf16>
    %c2_18 = arith.constant 2 : index
    %c0_19 = arith.constant 0 : index
    %c0_20 = arith.constant 0 : index
    %28 = vector.load %arg3[%c2_18, %c0_19, %c0_20] : memref<8x128x128xbf16, #tpu.memory_space<vmem>>, vector<1x128x128xbf16>
    %29 = vector.shape_cast %28 : vector<1x128x128xbf16> to vector<128x128xbf16>
    %cst_21 = arith.constant dense<0.000000e+00> : vector<32x128xf32>
    %30 = tpu.matmul %27, %29, %cst_21 {dimension_numbers = #tpu.dot_dimension_numbers<[1], [0], [0], [1], [0, 0, 1, 1], [], []>} : vector<32x128xbf16>, vector<128x128xbf16>, vector<32x128xf32> -> vector<32x128xf32>
    %c3 = arith.constant 3 : index
    %c0_22 = arith.constant 0 : index
    %31 = vector.load %arg5[%c3, %c0_22] : memref<16x784xf32, #tpu.memory_space<vmem>>, vector<1x128xf32>
    %32 = vector.broadcast %31 : vector<1x128xf32> to vector<32x128xf32>
    %33 = arith.addf %30, %32 : vector<32x128xf32>
    %cst_23 = arith.constant 0.000000e+00 : f32
    %34 = vector.broadcast %cst_23 : f32 to vector<32x128xf32>
    %35 = arith.maximumf %33, %34 : vector<32x128xf32>
    %36 = arith.truncf %35 : vector<32x128xf32> to vector<32x128xbf16>
    %c3_24 = arith.constant 3 : index
    %c0_25 = arith.constant 0 : index
    %c0_26 = arith.constant 0 : index
    %37 = vector.load %arg3[%c3_24, %c0_25, %c0_26] : memref<8x128x128xbf16, #tpu.memory_space<vmem>>, vector<1x128x128xbf16>
    %38 = vector.shape_cast %37 : vector<1x128x128xbf16> to vector<128x128xbf16>
    %cst_27 = arith.constant dense<0.000000e+00> : vector<32x128xf32>
    %39 = tpu.matmul %36, %38, %cst_27 {dimension_numbers = #tpu.dot_dimension_numbers<[1], [0], [0], [1], [0, 0, 1, 1], [], []>} : vector<32x128xbf16>, vector<128x128xbf16>, vector<32x128xf32> -> vector<32x128xf32>
    %c4 = arith.constant 4 : index
    %c0_28 = arith.constant 0 : index
    %40 = vector.load %arg5[%c4, %c0_28] : memref<16x784xf32, #tpu.memory_space<vmem>>, vector<1x128xf32>
    %41 = vector.broadcast %40 : vector<1x128xf32> to vector<32x128xf32>
    %42 = arith.addf %39, %41 : vector<32x128xf32>
    %43 = arith.truncf %42 : vector<32x128xf32> to vector<32x128xbf16>
    %c4_29 = arith.constant 4 : index
    %c0_30 = arith.constant 0 : index
    %c0_31 = arith.constant 0 : index
    %44 = vector.load %arg3[%c4_29, %c0_30, %c0_31] : memref<8x128x128xbf16, #tpu.memory_space<vmem>>, vector<1x128x128xbf16>
    %45 = vector.shape_cast %44 : vector<1x128x128xbf16> to vector<128x128xbf16>
    %cst_32 = arith.constant dense<0.000000e+00> : vector<32x128xf32>
    %46 = tpu.matmul %43, %45, %cst_32 {dimension_numbers = #tpu.dot_dimension_numbers<[1], [0], [0], [1], [0, 0, 1, 1], [], []>} : vector<32x128xbf16>, vector<128x128xbf16>, vector<32x128xf32> -> vector<32x128xf32>
    %c5 = arith.constant 5 : index
    %c0_33 = arith.constant 0 : index
    %47 = vector.load %arg5[%c5, %c0_33] : memref<16x784xf32, #tpu.memory_space<vmem>>, vector<1x128xf32>
    %48 = vector.broadcast %47 : vector<1x128xf32> to vector<32x128xf32>
    %49 = arith.addf %46, %48 : vector<32x128xf32>
    %cst_34 = arith.constant 0.000000e+00 : f32
    %50 = vector.broadcast %cst_34 : f32 to vector<32x128xf32>
    %51 = arith.maximumf %49, %50 : vector<32x128xf32>
    %52 = arith.truncf %51 : vector<32x128xf32> to vector<32x128xbf16>
    %c5_35 = arith.constant 5 : index
    %c0_36 = arith.constant 0 : index
    %c0_37 = arith.constant 0 : index
    %53 = vector.load %arg3[%c5_35, %c0_36, %c0_37] : memref<8x128x128xbf16, #tpu.memory_space<vmem>>, vector<1x128x128xbf16>
    %54 = vector.shape_cast %53 : vector<1x128x128xbf16> to vector<128x128xbf16>
    %cst_38 = arith.constant dense<0.000000e+00> : vector<32x128xf32>
    %55 = tpu.matmul %52, %54, %cst_38 {dimension_numbers = #tpu.dot_dimension_numbers<[1], [0], [0], [1], [0, 0, 1, 1], [], []>} : vector<32x128xbf16>, vector<128x128xbf16>, vector<32x128xf32> -> vector<32x128xf32>
    %c6 = arith.constant 6 : index
    %c0_39 = arith.constant 0 : index
    %56 = vector.load %arg5[%c6, %c0_39] : memref<16x784xf32, #tpu.memory_space<vmem>>, vector<1x128xf32>
    %57 = vector.broadcast %56 : vector<1x128xf32> to vector<32x128xf32>
    %58 = arith.addf %55, %57 : vector<32x128xf32>
    %cst_40 = arith.constant 0.000000e+00 : f32
    %59 = vector.broadcast %cst_40 : f32 to vector<32x128xf32>
    %60 = arith.maximumf %58, %59 : vector<32x128xf32>
    %61 = arith.truncf %60 : vector<32x128xf32> to vector<32x128xbf16>
    %c6_41 = arith.constant 6 : index
    %c0_42 = arith.constant 0 : index
    %c0_43 = arith.constant 0 : index
    %62 = vector.load %arg3[%c6_41, %c0_42, %c0_43] : memref<8x128x128xbf16, #tpu.memory_space<vmem>>, vector<1x128x128xbf16>
    %63 = vector.shape_cast %62 : vector<1x128x128xbf16> to vector<128x128xbf16>
    %cst_44 = arith.constant dense<0.000000e+00> : vector<32x128xf32>
    %64 = tpu.matmul %61, %63, %cst_44 {dimension_numbers = #tpu.dot_dimension_numbers<[1], [0], [0], [1], [0, 0, 1, 1], [], []>} : vector<32x128xbf16>, vector<128x128xbf16>, vector<32x128xf32> -> vector<32x128xf32>
    %c7 = arith.constant 7 : index
    %c0_45 = arith.constant 0 : index
    %65 = vector.load %arg5[%c7, %c0_45] : memref<16x784xf32, #tpu.memory_space<vmem>>, vector<1x128xf32>
    %66 = vector.broadcast %65 : vector<1x128xf32> to vector<32x128xf32>
    %67 = arith.addf %64, %66 : vector<32x128xf32>
    %cst_46 = arith.constant 0.000000e+00 : f32
    %68 = vector.broadcast %cst_46 : f32 to vector<32x128xf32>
    %69 = arith.maximumf %67, %68 : vector<32x128xf32>
    %70 = arith.truncf %69 : vector<32x128xf32> to vector<32x128xbf16>
    %c7_47 = arith.constant 7 : index
    %c0_48 = arith.constant 0 : index
    %c0_49 = arith.constant 0 : index
    %71 = vector.load %arg3[%c7_47, %c0_48, %c0_49] : memref<8x128x128xbf16, #tpu.memory_space<vmem>>, vector<1x128x128xbf16>
    %72 = vector.shape_cast %71 : vector<1x128x128xbf16> to vector<128x128xbf16>
    %cst_50 = arith.constant dense<0.000000e+00> : vector<32x128xf32>
    %73 = tpu.matmul %70, %72, %cst_50 {dimension_numbers = #tpu.dot_dimension_numbers<[1], [0], [0], [1], [0, 0, 1, 1], [], []>} : vector<32x128xbf16>, vector<128x128xbf16>, vector<32x128xf32> -> vector<32x128xf32>
    %c8 = arith.constant 8 : index
    %c0_51 = arith.constant 0 : index
    %74 = vector.load %arg5[%c8, %c0_51] : memref<16x784xf32, #tpu.memory_space<vmem>>, vector<1x128xf32>
    %75 = vector.broadcast %74 : vector<1x128xf32> to vector<32x128xf32>
    %76 = arith.addf %73, %75 : vector<32x128xf32>
    %77 = arith.truncf %76 : vector<32x128xf32> to vector<32x128xbf16>
    %c0_52 = arith.constant 0 : index
    %c0_53 = arith.constant 0 : index
    %78 = vector.load %arg4[%c0_52, %c0_53] : memref<128x784xbf16, #tpu.memory_space<vmem>>, vector<128x784xbf16>
    %cst_54 = arith.constant dense<0.000000e+00> : vector<32x784xf32>
    %79 = tpu.matmul %77, %78, %cst_54 {dimension_numbers = #tpu.dot_dimension_numbers<[1], [0], [0], [1], [0, 0, 1, 1], [], []>} : vector<32x128xbf16>, vector<128x784xbf16>, vector<32x784xf32> -> vector<32x784xf32>
    %c9 = arith.constant 9 : index
    %c0_55 = arith.constant 0 : index
    %80 = vector.load %arg5[%c9, %c0_55] : memref<16x784xf32, #tpu.memory_space<vmem>>, vector<1x784xf32>
    %81 = vector.broadcast %80 : vector<1x784xf32> to vector<32x784xf32>
    %82 = arith.addf %79, %81 : vector<32x784xf32>
    %83 = arith.negf %82 : vector<32x784xf32>
    %84 = math.exp %83 : vector<32x784xf32>
    %cst_56 = arith.constant 1.000000e+00 : f32
    %85 = vector.broadcast %cst_56 : f32 to vector<32x784xf32>
    %86 = arith.addf %85, %84 : vector<32x784xf32>
    %87 = arith.divf %85, %86 : vector<32x784xf32>
    %88 = arith.truncf %87 : vector<32x784xf32> to vector<32x784xbf16>
    %c0_57 = arith.constant 0 : index
    %c0_58 = arith.constant 0 : index
    %89 = vector.load %arg6[%c0_57, %c0_58] : memref<32x784xbf16, #tpu.memory_space<vmem>>, vector<32x784xbf16>
    tpu.vector_store %arg6[%c0_57, %c0_58], %88 {strides = array<i32>} : memref<32x784xbf16, #tpu.memory_space<vmem>>, vector<32x784xbf16>,
    return
  }
  func.func @transform_0(%arg0: i32) -> (i32, i32) {
    %c0_i32 = arith.constant 0 : i32
    %c0_i32_0 = arith.constant 0 : i32
    return %arg0, %c0_i32 : i32, i32
  }
  func.func @transform_1(%arg0: i32) -> (i32, i32) {
    %c0_i32 = arith.constant 0 : i32
    %c0_i32_0 = arith.constant 0 : i32
    %c0_i32_1 = arith.constant 0 : i32
    return %c0_i32, %c0_i32_0 : i32, i32
  }
  func.func @transform_2(%arg0: i32) -> (i32, i32, i32) {
    %c0_i32 = arith.constant 0 : i32
    %c0_i32_0 = arith.constant 0 : i32
    %c0_i32_1 = arith.constant 0 : i32
    %c0_i32_2 = arith.constant 0 : i32
    return %c0_i32, %c0_i32_0, %c0_i32_1 : i32, i32, i32
  }
  func.func @transform_3(%arg0: i32) -> (i32, i32) {
    %c0_i32 = arith.constant 0 : i32
    %c0_i32_0 = arith.constant 0 : i32
    %c0_i32_1 = arith.constant 0 : i32
    return %c0_i32, %c0_i32_0 : i32, i32
  }
  func.func @transform_4(%arg0: i32) -> (i32, i32) {
    %c0_i32 = arith.constant 0 : i32
    %c0_i32_0 = arith.constant 0 : i32
    %c0_i32_1 = arith.constant 0 : i32
    return %c0_i32, %c0_i32_0 : i32, i32
  }
  func.func @transform_5(%arg0: i32) -> (i32, i32) {
    %c0_i32 = arith.constant 0 : i32
    %c0_i32_0 = arith.constant 0 : i32
    return %arg0, %c0_i32 : i32, i32
  }
}

</mosaic_0001>

<llo_original>
// kernel: tpu_custom_call.1
$region0: #{tpu_custom_call.1}
  #allocation0 [shape = 'u32[]', space=smem, size = 0x4, offset = 0x4, fixed_abs, tag = 'smem constant byte address 0x4 - core index']
  #allocation1 [shape = 'u32[72,128]{1,0:T(1,128)}', space=vmem, size = 0x9000, scoped, tag = 'internal scratch']
  %s0 = inlined_call_operand.hbm [shape: f32[64,784], index: 0, kind: input, shape index: {}]
  %s1 = inlined_call_operand.hbm [shape: bf16[784,128], index: 1, kind: input, shape index: {}]
  %s2 = inlined_call_operand.vmem [shape: bf16[8,128,128], index: 2, kind: input, shape index: {}]
  %s3 = inlined_call_operand.vmem [shape: bf16[128,784], index: 3, kind: input, shape index: {}]
  %s4 = inlined_call_operand.vmem [shape: f32[16,784], index: 4, kind: input, shape index: {}]
  %s5 = inlined_call_operand.hbm [shape: bf16[64,784], index: 5, kind: output, shape index: {}]
  %s6 = sld [smem:[#allocation0]]
  $region61: #{tpu_custom_call.1} parent=0
    _
  %s8 = ssub.s32 1, %s6
  %s9 = scalar_select 0, %s8, %s6
  $region1: #{tpu_custom_call.1} parent=0
    #allocation2 [shape = 'u8[229376]{0}', space=vmem, size = 0x38000, scoped, tag = 'input window, operand 0']
    #allocation3 [shape = 's32[2]{0}', space=sflag, size = 0x8, scoped, tag = 'scoped memory for tpu_custom_call.1']
    #allocation4 [shape = 's32[2]{0}', space=sflag, size = 0x8, scoped, tag = 'scoped memory for tpu_custom_call.1']
    #allocation5 [shape = 'u8[200704]{0}', space=vmem, size = 0x31000, scoped, tag = 'input window, operand 1, single buffered']
    #allocation6 [shape = 's32[1]{0}', space=sflag, size = 0x4, scoped, tag = 'scoped memory for tpu_custom_call.1']
    #allocation7 [shape = 'u8[114688]{0}', space=vmem, size = 0x1c000, scoped, tag = 'output window, operand 0']
    %10 = vsyncpa [#allocation3], 0
    %s11 = scalar_lea.sflag [#allocation3], 1
    %12 = vsyncpa %s11, 0
    %13 = vsyncpa [#allocation6], 0
    %14 = vsyncpa [#allocation4], 0
    %s15 = scalar_lea.sflag [#allocation4], 1
    %16 = vsyncpa %s15, 0
    loop: start=0, step=1, limit=4
    $region2: #{tpu_custom_call.1} parent=1 // loop_pre_header
      _
    $region3: #{tpu_custom_call.1} parent=1 // loop_header
      %s18 = sphi 0, %s22
      %p19 = scmp.ge.s32.totalorder %s18, 4
      %s28 = sphi 0, %s30
      %s31 = sphi 0, %s28
      %s32 = sphi 0, %s31
      %s48 = sphi 0, %s32
      %s52 = sphi 0, %s52
      %s54 = sphi 0, %s52
      %s55 = sphi 0, %s54
      %s69 = sphi 0, %s55
      %s73 = sphi 0, %s73
      %s75 = sphi 0, %s73
      %s76 = sphi 0, %s75
      %s90 = sphi 0, %s76
      %s94 = sphi 0, %s94
      %s96 = sphi 0, %s94
      %s97 = sphi 0, %s96
      %s111 = sphi 0, %s97
      %s115 = sphi 0, %s115
      %s117 = sphi 0, %s115
      %s118 = sphi 0, %s117
      %s132 = sphi 0, %s118
      %s138 = sphi 0, %s140
      %s141 = sphi 0, %s138
      %s142 = sphi 0, %s141
      %s158 = sphi 0, %s142
    $region4: #{tpu_custom_call.1} parent=1 // loop_header_branch
      %21 = sbr.rel (%p19) target = $region8
    $region5: #{tpu_custom_call.1} parent=1 // loop_body
      %s23 = ssub.s32 %s18, 1
      %s24 = ssub.s32 %s18, 2
      %s25 = sadd.s32 %s18, 1
      %s26 = ssub.s32 %s18, %s25
      %p27 = scmp.eq.s32.totalorder %s26, 0
      %s29 = sadd.s32 %s28, 1
      %s30 = scalar_select %p27, %s28, %s29
      %p33 = pneg %p27
      %p34 = scmp.eq.s32.totalorder %s18, 1
      %p35 = por %p33, %p34
      %p36 = scmp.ne.s32.totalorder %s28, %s31
      %p37 = scmp.eq.s32.totalorder %s18, 0
      %p38 = por %p36, %p37
      %p39 = scmp.ne.s32.totalorder %s28, %s31
      %p40 = scmp.eq.s32.totalorder %s23, 1
      %p41 = por %p39, %p40
      %p42 = scmp.ne.s32.totalorder %s31, %s32
      %p43 = scmp.eq.s32.totalorder %s23, 0
      %p44 = por %p42, %p43
      %p45 = scmp.ne.s32.totalorder %s31, %s32
      %p46 = scmp.eq.s32.totalorder %s24, 1
      %p47 = por %p45, %p46
      %p49 = scmp.ne.s32.totalorder %s32, %s48
      %p50 = scmp.eq.s32.totalorder %s24, 0
      %p51 = por %p49, %p50
      %s53 = sadd.s32 %s52, 1
      %p56 = scmp.eq.s32.totalorder %s18, 1
      %p57 = scmp.ne.s32.totalorder %s52, %s54
      %p58 = scmp.eq.s32.totalorder %s18, 0
      %p59 = por %p57, %p58
      %p60 = scmp.ne.s32.totalorder %s52, %s54
      %p61 = scmp.eq.s32.totalorder %s23, 1
      %p62 = por %p60, %p61
      %p63 = scmp.ne.s32.totalorder %s54, %s55
      %p64 = scmp.eq.s32.totalorder %s23, 0
      %p65 = por %p63, %p64
      %p66 = scmp.ne.s32.totalorder %s54, %s55
      %p67 = scmp.eq.s32.totalorder %s24, 1
      %p68 = por %p66, %p67
      %p70 = scmp.ne.s32.totalorder %s55, %s69
      %p71 = scmp.eq.s32.totalorder %s24, 0
      %p72 = por %p70, %p71
      %s74 = sadd.s32 %s73, 1
      %p77 = scmp.eq.s32.totalorder %s18, 1
      %p78 = scmp.ne.s32.totalorder %s73, %s75
      %p79 = scmp.eq.s32.totalorder %s18, 0
      %p80 = por %p78, %p79
      %p81 = scmp.ne.s32.totalorder %s73, %s75
      %p82 = scmp.eq.s32.totalorder %s23, 1
      %p83 = por %p81, %p82
      %p84 = scmp.ne.s32.totalorder %s75, %s76
      %p85 = scmp.eq.s32.totalorder %s23, 0
      %p86 = por %p84, %p85
      %p87 = scmp.ne.s32.totalorder %s75, %s76
      %p88 = scmp.eq.s32.totalorder %s24, 1
      %p89 = por %p87, %p88
      %p91 = scmp.ne.s32.totalorder %s76, %s90
      %p92 = scmp.eq.s32.totalorder %s24, 0
      %p93 = por %p91, %p92
      %s95 = sadd.s32 %s94, 1
      %p98 = scmp.eq.s32.totalorder %s18, 1
      %p99 = scmp.ne.s32.totalorder %s94, %s96
      %p100 = scmp.eq.s32.totalorder %s18, 0
      %p101 = por %p99, %p100
      %p102 = scmp.ne.s32.totalorder %s94, %s96
      %p103 = scmp.eq.s32.totalorder %s23, 1
      %p104 = por %p102, %p103
      %p105 = scmp.ne.s32.totalorder %s96, %s97
      %p106 = scmp.eq.s32.totalorder %s23, 0
      %p107 = por %p105, %p106
      %p108 = scmp.ne.s32.totalorder %s96, %s97
      %p109 = scmp.eq.s32.totalorder %s24, 1
      %p110 = por %p108, %p109
      %p112 = scmp.ne.s32.totalorder %s97, %s111
      %p113 = scmp.eq.s32.totalorder %s24, 0
      %p114 = por %p112, %p113
      %s116 = sadd.s32 %s115, 1
      %p119 = scmp.eq.s32.totalorder %s18, 1
      %p120 = scmp.ne.s32.totalorder %s115, %s117
      %p121 = scmp.eq.s32.totalorder %s18, 0
      %p122 = por %p120, %p121
      %p123 = scmp.ne.s32.totalorder %s115, %s117
      %p124 = scmp.eq.s32.totalorder %s23, 1
      %p125 = por %p123, %p124
      %p126 = scmp.ne.s32.totalorder %s117, %s118
      %p127 = scmp.eq.s32.totalorder %s23, 0
      %p128 = por %p126, %p127
      %p129 = scmp.ne.s32.totalorder %s117, %s118
      %p130 = scmp.eq.s32.totalorder %s24, 1
      %p131 = por %p129, %p130
      %p133 = scmp.ne.s32.totalorder %s118, %s132
      %p134 = scmp.eq.s32.totalorder %s24, 0
      %p135 = por %p133, %p134
      %s136 = ssub.s32 %s18, %s25
      %p137 = scmp.eq.s32.totalorder %s136, 0
      %s139 = sadd.s32 %s138, 1
      %s140 = scalar_select %p137, %s138, %s139
      %p143 = pneg %p137
      %p144 = scmp.eq.s32.totalorder %s18, 1
      %p145 = por %p143, %p144
      %p146 = scmp.ne.s32.totalorder %s138, %s141
      %p147 = scmp.eq.s32.totalorder %s18, 0
      %p148 = por %p146, %p147
      %p149 = scmp.ne.s32.totalorder %s138, %s141
      %p150 = scmp.eq.s32.totalorder %s23, 1
      %p151 = por %p149, %p150
      %p152 = scmp.ne.s32.totalorder %s141, %s142
      %p153 = scmp.eq.s32.totalorder %s23, 0
      %p154 = por %p152, %p153
      %p155 = scmp.ne.s32.totalorder %s141, %s142
      %p156 = scmp.eq.s32.totalorder %s24, 1
      %p157 = por %p155, %p156
      %p159 = scmp.ne.s32.totalorder %s142, %s158
      %p160 = scmp.eq.s32.totalorder %s24, 0
      %p161 = por %p159, %p160
      %p162 = scmp.le.s32.totalorder 1, %s18
      %p163 = scmp.lt.s32.totalorder %s18, 3
      %p164 = pnand %p162, %p163
      %p165 = pneg %p164
      // Predicated region
      $region9: #{tpu_custom_call.1} parent=5 // pred_check
        _
      $region10: #{tpu_custom_call.1} parent=5 // pred_check_branch
        %167 = sbr.rel (%p164) target = $region12
      $region11: #{tpu_custom_call.1} parent=5 // pred_region
        %s168 = ssub.s32 %s18, 1
        // Predicated region
        $region13: #{tpu_custom_call.1} parent=11 // pred_check
          %p169 = pneg %p65
        $region14: #{tpu_custom_call.1} parent=11 // pred_check_branch
          %171 = sbr.rel (%p169) target = $region16
        $region15: #{tpu_custom_call.1} parent=11 // pred_region
          %173 = vsyncadd [#allocation6], 0
          %s174 = sshll.u32 %s1, 4
          %s175 = int_to_ptr.hbm [resolvable:$true] %s174
          %s176 = sshll.u32 [#allocation5], 4
          %s177 = int_to_ptr.vmem [resolvable:$true] %s176
          %182 = dma.hbm_to_vmem [thread:$0]  %s175, 6272, %s177, [#allocation6], 64, 64, 4
        $region16: #{tpu_custom_call.1} parent=11 // pred_fallthru
          _
        // Predicated region
        $region17: #{tpu_custom_call.1} parent=11 // pred_check
          %p183 = pneg %p86
        $region18: #{tpu_custom_call.1} parent=11 // pred_check_branch
          %185 = sbr.rel (%p183) target = $region20
        $region19: #{tpu_custom_call.1} parent=11 // pred_region
          _
        $region20: #{tpu_custom_call.1} parent=11 // pred_fallthru
          _
        // Predicated region
        $region21: #{tpu_custom_call.1} parent=11 // pred_check
          %p186 = pneg %p107
        $region22: #{tpu_custom_call.1} parent=11 // pred_check_branch
          %188 = sbr.rel (%p186) target = $region24
        $region23: #{tpu_custom_call.1} parent=11 // pred_region
          _
        $region24: #{tpu_custom_call.1} parent=11 // pred_fallthru
          _
        // Predicated region
        $region25: #{tpu_custom_call.1} parent=11 // pred_check
          %p189 = pneg %p128
        $region26: #{tpu_custom_call.1} parent=11 // pred_check_branch
          %191 = sbr.rel (%p189) target = $region28
        $region27: #{tpu_custom_call.1} parent=11 // pred_region
          _
        $region28: #{tpu_custom_call.1} parent=11 // pred_fallthru
          _
      $region12: #{tpu_custom_call.1} parent=5 // pred_fallthru
        _
      %p192 = scmp.lt.s32.totalorder %s18, 2
      // Predicated region
      $region29: #{tpu_custom_call.1} parent=5 // pred_check
        %p193 = pneg %p192
      $region30: #{tpu_custom_call.1} parent=5 // pred_check_branch
        %195 = sbr.rel (%p193) target = $region32
      $region31: #{tpu_custom_call.1} parent=5 // pred_region
        // Predicated region
        $region33: #{tpu_custom_call.1} parent=31 // pred_check
          %p196 = pneg %p38
        $region34: #{tpu_custom_call.1} parent=31 // pred_check_branch
          %198 = sbr.rel (%p196) target = $region36
        $region35: #{tpu_custom_call.1} parent=31 // pred_region
          %s199 = sand.u32 %s28, 1
          %s200 = scalar_lea.sflag [#allocation3], %s199
          %s201 = sand.u32 %s28, 1
          %s202 = smul.addr %s201, 224
          %s203 = scalar_lea.vmem [#allocation2], %s202
          %s204 = smul.u32 4, %s18
          %206 = vsyncadd %s200, 0
          %s207 = smul.addr %s204, 7
          %s208 = smul.addr %s207, 8
          %s209 = scalar_lea.hbm %s0, %s208
          %s210 = sshll.u32 %s209, 4
          %s211 = int_to_ptr.hbm [resolvable:$true] %s210
          %s212 = sshll.u32 %s203, 4
          %s213 = int_to_ptr.vmem [resolvable:$true] %s212
          %218 = dma.hbm_to_vmem [thread:$0]  %s211, 3584, %s213, %s200, 896, 896, 56
        $region36: #{tpu_custom_call.1} parent=31 // pred_fallthru
          _
      $region32: #{tpu_custom_call.1} parent=5 // pred_fallthru
        _
      %p219 = scmp.le.s32.totalorder 1, %s18
      %p220 = scmp.lt.s32.totalorder %s18, 3
      %p221 = pnand %p219, %p220
      %p222 = pneg %p221
      // Predicated region
      $region37: #{tpu_custom_call.1} parent=5 // pred_check
        _
      $region38: #{tpu_custom_call.1} parent=5 // pred_check_branch
        %224 = sbr.rel (%p221) target = $region40
      $region39: #{tpu_custom_call.1} parent=5 // pred_region
        %s225 = ssub.s32 %s18, 1
        %s226 = sand.u32 %s31, 1
        %s227 = scalar_lea.sflag [#allocation3], %s226
        %s228 = sand.u32 %s31, 1
        %s229 = smul.addr %s228, 224
        %s230 = scalar_lea.vmem [#allocation2], %s229
        // Predicated region
        $region41: #{tpu_custom_call.1} parent=39 // pred_check
          %p231 = pneg %p44
        $region42: #{tpu_custom_call.1} parent=39 // pred_check_branch
          %233 = sbr.rel (%p231) target = $region44
        $region43: #{tpu_custom_call.1} parent=39 // pred_region
          %235 = dma.done %s227, 3584
        $region44: #{tpu_custom_call.1} parent=39 // pred_fallthru
          _
        // Predicated region
        $region45: #{tpu_custom_call.1} parent=39 // pred_check
          %p236 = pneg %p65
        $region46: #{tpu_custom_call.1} parent=39 // pred_check_branch
          %238 = sbr.rel (%p236) target = $region48
        $region47: #{tpu_custom_call.1} parent=39 // pred_region
          %240 = dma.done [#allocation6], 6272
        $region48: #{tpu_custom_call.1} parent=39 // pred_fallthru
          _
        %s241 = sand.u32 %s31, 1
        %s242 = scalar_lea.sflag [#allocation3], %s241
        %s243 = sand.u32 %s31, 1
        %s244 = smul.addr %s243, 224
        %s245 = scalar_lea.vmem [#allocation2], %s244
        %p246 = pneg %p44
        %p247 = pneg %p41
        %p248 = pneg %p65
        %p249 = pneg %p62
        %p250 = pneg %p86
        %p251 = pneg %p83
        %p252 = pneg %p107
        %p253 = pneg %p104
        %p254 = pneg %p128
        %p255 = pneg %p125
        %p256 = pneg %p154
        %p257 = pneg %p151
        %s258 = sand.u32 %s141, 1
        %s259 = scalar_lea.sflag [#allocation4], %s258
        %s260 = sand.u32 %s141, 1
        %s261 = smul.addr %s260, 112
        %s262 = scalar_lea.vmem [#allocation7], %s261
        %s263 = smul.u32 4, %s23
        %s264 = smul.u32 4, %s23
        %v266 = vld [vmem:[%s230] sm:$0xff]
        %v267 = vld [vmem:[%s230 + $0x8] sm:$0xff]
        %v268 = vld [vmem:[%s230 + $0x10] sm:$0xff]
        %v269 = vld [vmem:[%s230 + $0x18] sm:$0xff]
        %v270 = vld [vmem:[%s230 + $0x20] sm:$0xff]
        %v271 = vld [vmem:[%s230 + $0x28] sm:$0xff]
        %v272 = vld [vmem:[%s230 + $0x30] sm:$0xff]
        %v273 = vld [vmem:[%s230 + $0x38] sm:$0xff]
        %v274 = vld [vmem:[%s230 + $0x40] sm:$0xff]
        %v275 = vld [vmem:[%s230 + $0x48] sm:$0xff]
        %v276 = vld [vmem:[%s230 + $0x50] sm:$0xff]
        %v277 = vld [vmem:[%s230 + $0x58] sm:$0xff]
        %v278 = vld [vmem:[%s230 + $0x60] sm:$0xff]
        %v279 = vld [vmem:[%s230 + $0x68] sm:$0xff]
        %v280 = vld [vmem:[%s230 + $0x70] sm:$0xff]
        %v281 = vld [vmem:[%s230 + $0x78] sm:$0xff]
        %v282 = vld [vmem:[%s230 + $0x80] sm:$0xff]
        %v283 = vld [vmem:[%s230 + $0x88] sm:$0xff]
        %v284 = vld [vmem:[%s230 + $0x90] sm:$0xff]
        %v285 = vld [vmem:[%s230 + $0x98] sm:$0xff]
        %v286 = vld [vmem:[%s230 + $0xa0] sm:$0xff]
        %v287 = vld [vmem:[%s230 + $0xa8] sm:$0xff]
        %v288 = vld [vmem:[%s230 + $0xb0] sm:$0xff]
        %v289 = vld [vmem:[%s230 + $0xb8] sm:$0xff]
        %v290 = vld [vmem:[%s230 + $0xc0] sm:$0xff]
        %v291 = vld [vmem:[%s230 + $0xc8] sm:$0xff]
        %v292 = vld [vmem:[%s230 + $0xd0] sm:$0xff]
        %v293 = vld [vmem:[%s230 + $0xd8] sm:$0xff]
        %v294 = vpack.c.bf16 %v273, %v266
        %v295 = vpack.c.bf16 %v274, %v267
        %v296 = vpack.c.bf16 %v275, %v268
        %v297 = vpack.c.bf16 %v276, %v269
        %v298 = vpack.c.bf16 %v277, %v270
        %v299 = vpack.c.bf16 %v278, %v271
        %v300 = vpack.c.bf16 %v279, %v272
        %v301 = vpack.c.bf16 %v287, %v280
        %v302 = vpack.c.bf16 %v288, %v281
        %v303 = vpack.c.bf16 %v289, %v282
        %v304 = vpack.c.bf16 %v290, %v283
        %v305 = vpack.c.bf16 %v291, %v284
        %v306 = vpack.c.bf16 %v292, %v285
        %v307 = vpack.c.bf16 %v293, %v286
        %v308 = vld [vmem:[#allocation5] sm:$0xf]
        %v309 = vld [vmem:[#allocation5 + $0x4] sm:$0xf]
        %v310 = vld [vmem:[#allocation5 + $0x8] sm:$0xf]
        %v311 = vld [vmem:[#allocation5 + $0xc] sm:$0xf]
        %v312 = vld [vmem:[#allocation5 + $0x10] sm:$0xf]
        %v313 = vld [vmem:[#allocation5 + $0x14] sm:$0xf]
        %v314 = vld [vmem:[#allocation5 + $0x18] sm:$0xf]
        %v315 = vld [vmem:[#allocation5 + $0x1c] sm:$0xf]
        %v316 = vld [vmem:[#allocation5 + $0x20] sm:$0xf]
        %v317 = vld [vmem:[#allocation5 + $0x24] sm:$0xf]
        %v318 = vld [vmem:[#allocation5 + $0x28] sm:$0xf]
        %v319 = vld [vmem:[#allocation5 + $0x2c] sm:$0xf]
        %v320 = vld [vmem:[#allocation5 + $0x30] sm:$0xf]
        %v321 = vld [vmem:[#allocation5 + $0x34] sm:$0xf]
        %v322 = vld [vmem:[#allocation5 + $0x38] sm:$0xf]
        %v323 = vld [vmem:[#allocation5 + $0x3c] sm:$0xf]
        %v324 = vld [vmem:[#allocation5 + $0x40] sm:$0xf]
        %v325 = vld [vmem:[#allocation5 + $0x44] sm:$0xf]
        %v326 = vld [vmem:[#allocation5 + $0x48] sm:$0xf]
        %v327 = vld [vmem:[#allocation5 + $0x4c] sm:$0xf]
        %v328 = vld [vmem:[#allocation5 + $0x50] sm:$0xf]
        %v329 = vld [vmem:[#allocation5 + $0x54] sm:$0xf]
        %v330 = vld [vmem:[#allocation5 + $0x58] sm:$0xf]
        %v331 = vld [vmem:[#allocation5 + $0x5c] sm:$0xf]
        %v332 = vld [vmem:[#allocation5 + $0x60] sm:$0xf]
        %v333 = vld [vmem:[#allocation5 + $0x64] sm:$0xf]
        %v334 = vld [vmem:[#allocation5 + $0x68] sm:$0xf]
        %v335 = vld [vmem:[#allocation5 + $0x6c] sm:$0xf]
        %v336 = vld [vmem:[#allocation5 + $0x70] sm:$0xf]
        %v337 = vld [vmem:[#allocation5 + $0x74] sm:$0xf]
        %v338 = vld [vmem:[#allocation5 + $0x78] sm:$0xf]
        %v339 = vld [vmem:[#allocation5 + $0x7c] sm:$0xf]
        %v340 = vld [vmem:[#allocation5 + $0x80] sm:$0xf]
        %v341 = vld [vmem:[#allocation5 + $0x84] sm:$0xf]
        %v342 = vld [vmem:[#allocation5 + $0x88] sm:$0xf]
        %v343 = vld [vmem:[#allocation5 + $0x8c] sm:$0xf]
        %v344 = vld [vmem:[#allocation5 + $0x90] sm:$0xf]
        %v345 = vld [vmem:[#allocation5 + $0x94] sm:$0xf]
        %v346 = vld [vmem:[#allocation5 + $0x98] sm:$0xf]
        %v347 = vld [vmem:[#allocation5 + $0x9c] sm:$0xf]
        %v348 = vld [vmem:[#allocation5 + $0xa0] sm:$0xf]
        %v349 = vld [vmem:[#allocation5 + $0xa4] sm:$0xf]
        %v350 = vld [vmem:[#allocation5 + $0xa8] sm:$0xf]
        %v351 = vld [vmem:[#allocation5 + $0xac] sm:$0xf]
        %v352 = vld [vmem:[#allocation5 + $0xb0] sm:$0xf]
        %v353 = vld [vmem:[#allocation5 + $0xb4] sm:$0xf]
        %v354 = vld [vmem:[#allocation5 + $0xb8] sm:$0xf]
        %v355 = vld [vmem:[#allocation5 + $0xbc] sm:$0xf]
        %v356 = vld [vmem:[#allocation5 + $0xc0] sm:$0xf]
        %v357 = vld [vmem:[#allocation5 + $0xc4] sm:$0xf]
        %v358 = vld [vmem:[#allocation5 + $0xc8] sm:$0xf]
        %v359 = vld [vmem:[#allocation5 + $0xcc] sm:$0xf]
        %v360 = vld [vmem:[#allocation5 + $0xd0] sm:$0xf]
        %v361 = vld [vmem:[#allocation5 + $0xd4] sm:$0xf]
        %v362 = vld [vmem:[#allocation5 + $0xd8] sm:$0xf]
        %v363 = vld [vmem:[#allocation5 + $0xdc] sm:$0xf]
        %v364 = vld [vmem:[#allocation5 + $0xe0] sm:$0xf]
        %v365 = vld [vmem:[#allocation5 + $0xe4] sm:$0xf]
        %v366 = vld [vmem:[#allocation5 + $0xe8] sm:$0xf]
        %v367 = vld [vmem:[#allocation5 + $0xec] sm:$0xf]
        %v368 = vld [vmem:[#allocation5 + $0xf0] sm:$0xf]
        %v369 = vld [vmem:[#allocation5 + $0xf4] sm:$0xf]
        %v370 = vld [vmem:[#allocation5 + $0xf8] sm:$0xf]
        %v371 = vld [vmem:[#allocation5 + $0xfc] sm:$0xf]
        %v372 = vld [vmem:[#allocation5 + $0x100] sm:$0xf]
        %v373 = vld [vmem:[#allocation5 + $0x104] sm:$0xf]
        %v374 = vld [vmem:[#allocation5 + $0x108] sm:$0xf]
        %v375 = vld [vmem:[#allocation5 + $0x10c] sm:$0xf]
        %v376 = vld [vmem:[#allocation5 + $0x110] sm:$0xf]
        %v377 = vld [vmem:[#allocation5 + $0x114] sm:$0xf]
        %v378 = vld [vmem:[#allocation5 + $0x118] sm:$0xf]
        %v379 = vld [vmem:[#allocation5 + $0x11c] sm:$0xf]
        %v380 = vld [vmem:[#allocation5 + $0x120] sm:$0xf]
        %v381 = vld [vmem:[#allocation5 + $0x124] sm:$0xf]
        %v382 = vld [vmem:[#allocation5 + $0x128] sm:$0xf]
        %v383 = vld [vmem:[#allocation5 + $0x12c] sm:$0xf]
        %v384 = vld [vmem:[#allocation5 + $0x130] sm:$0xf]
        %v385 = vld [vmem:[#allocation5 + $0x134] sm:$0xf]
        %v386 = vld [vmem:[#allocation5 + $0x138] sm:$0xf]
        %v387 = vld [vmem:[#allocation5 + $0x13c] sm:$0xf]
        %v388 = vld [vmem:[#allocation5 + $0x140] sm:$0xf]
        %v389 = vld [vmem:[#allocation5 + $0x144] sm:$0xf]
        %v390 = vld [vmem:[#allocation5 + $0x148] sm:$0xf]
        %v391 = vld [vmem:[#allocation5 + $0x14c] sm:$0xf]
        %v392 = vld [vmem:[#allocation5 + $0x150] sm:$0xf]
        %v393 = vld [vmem:[#allocation5 + $0x154] sm:$0xf]
        %v394 = vld [vmem:[#allocation5 + $0x158] sm:$0xf]
        %v395 = vld [vmem:[#allocation5 + $0x15c] sm:$0xf]
        %v396 = vld [vmem:[#allocation5 + $0x160] sm:$0xf]
        %v397 = vld [vmem:[#allocation5 + $0x164] sm:$0xf]
        %v398 = vld [vmem:[#allocation5 + $0x168] sm:$0xf]
        %v399 = vld [vmem:[#allocation5 + $0x16c] sm:$0xf]
        %v400 = vld [vmem:[#allocation5 + $0x170] sm:$0xf]
        %v401 = vld [vmem:[#allocation5 + $0x174] sm:$0xf]
        %v402 = vld [vmem:[#allocation5 + $0x178] sm:$0xf]
        %v403 = vld [vmem:[#allocation5 + $0x17c] sm:$0xf]
        %v404 = vld [vmem:[#allocation5 + $0x180] sm:$0xf]
        %v405 = vld [vmem:[#allocation5 + $0x184] sm:$0xf]
        %v406 = vld [vmem:[%s4] ss:$0 sm:$0xff]
        %v505 = vunpack.c.l.b16 %v308
        %v506 = vunpack.c.l.b16 %v309
        %v507 = vunpack.c.l.b16 %v310
        %v508 = vunpack.c.l.b16 %v311
        %v509 = vunpack.c.l.b16 %v312
        %v510 = vunpack.c.l.b16 %v313
        %v511 = vunpack.c.l.b16 %v314
        %v512 = vunpack.c.l.b16 %v315
        %v513 = vunpack.c.l.b16 %v316
        %v514 = vunpack.c.l.b16 %v317
        %v515 = vunpack.c.l.b16 %v318
        %v516 = vunpack.c.l.b16 %v319
        %v517 = vunpack.c.l.b16 %v320
        %v518 = vunpack.c.l.b16 %v321
        %v519 = vunpack.c.l.b16 %v322
        %v520 = vunpack.c.l.b16 %v323
        %v521 = vunpack.c.l.b16 %v324
        %v522 = vunpack.c.l.b16 %v325
        %v523 = vunpack.c.l.b16 %v326
        %v524 = vunpack.c.l.b16 %v327
        %v525 = vunpack.c.l.b16 %v328
        %v526 = vunpack.c.l.b16 %v329
        %v527 = vunpack.c.l.b16 %v330
        %v528 = vunpack.c.l.b16 %v331
        %v529 = vunpack.c.l.b16 %v332
        %v530 = vunpack.c.l.b16 %v333
        %v531 = vunpack.c.l.b16 %v334
        %v532 = vunpack.c.l.b16 %v335
        %v533 = vunpack.c.l.b16 %v336
        %v534 = vunpack.c.l.b16 %v337
        %v535 = vunpack.c.l.b16 %v338
        %v536 = vunpack.c.l.b16 %v339
        %v537 = vunpack.c.l.b16 %v340
        %v538 = vunpack.c.l.b16 %v341
        %v539 = vunpack.c.l.b16 %v342
        %v540 = vunpack.c.l.b16 %v343
        %v541 = vunpack.c.l.b16 %v344
        %v542 = vunpack.c.l.b16 %v345
        %v543 = vunpack.c.l.b16 %v346
        %v544 = vunpack.c.l.b16 %v347
        %v545 = vunpack.c.l.b16 %v348
        %v546 = vunpack.c.l.b16 %v349
        %v547 = vunpack.c.l.b16 %v350
        %v548 = vunpack.c.l.b16 %v351
        %v549 = vunpack.c.l.b16 %v352
        %v550 = vunpack.c.l.b16 %v353
        %v551 = vunpack.c.l.b16 %v354
        %v552 = vunpack.c.l.b16 %v355
        %v553 = vunpack.c.l.b16 %v356
        %v554 = vunpack.c.l.b16 %v357
        %v555 = vunpack.c.l.b16 %v358
        %v556 = vunpack.c.l.b16 %v359
        %v557 = vunpack.c.l.b16 %v360
        %v558 = vunpack.c.l.b16 %v361
        %v559 = vunpack.c.l.b16 %v362
        %v560 = vunpack.c.l.b16 %v363
        %v561 = vunpack.c.l.b16 %v364
        %v562 = vunpack.c.l.b16 %v365
        %v563 = vunpack.c.l.b16 %v366
        %v564 = vunpack.c.l.b16 %v367
        %v565 = vunpack.c.l.b16 %v368
        %v566 = vunpack.c.l.b16 %v369
        %v567 = vunpack.c.l.b16 %v370
        %v568 = vunpack.c.l.b16 %v371
        %v569 = vunpack.c.l.b16 %v372
        %v570 = vunpack.c.l.b16 %v373
        %v571 = vunpack.c.l.b16 %v374
        %v572 = vunpack.c.l.b16 %v375
        %v573 = vunpack.c.l.b16 %v376
        %v574 = vunpack.c.l.b16 %v377
        %v575 = vunpack.c.l.b16 %v378
        %v576 = vunpack.c.l.b16 %v379
        %v577 = vunpack.c.l.b16 %v380
        %v578 = vunpack.c.l.b16 %v381
        %v579 = vunpack.c.l.b16 %v382
        %v580 = vunpack.c.l.b16 %v383
        %v581 = vunpack.c.l.b16 %v384
        %v582 = vunpack.c.l.b16 %v385
        %v583 = vunpack.c.l.b16 %v386
        %v584 = vunpack.c.l.b16 %v387
        %v585 = vunpack.c.l.b16 %v388
        %v586 = vunpack.c.l.b16 %v389
        %v587 = vunpack.c.l.b16 %v390
        %v588 = vunpack.c.l.b16 %v391
        %v589 = vunpack.c.l.b16 %v392
        %v590 = vunpack.c.l.b16 %v393
        %v591 = vunpack.c.l.b16 %v394
        %v592 = vunpack.c.l.b16 %v395
        %v593 = vunpack.c.l.b16 %v396
        %v594 = vunpack.c.l.b16 %v397
        %v595 = vunpack.c.l.b16 %v398
        %v596 = vunpack.c.l.b16 %v399
        %v597 = vunpack.c.l.b16 %v400
        %v598 = vunpack.c.l.b16 %v401
        %v599 = vunpack.c.l.b16 %v402
        %v600 = vunpack.c.l.b16 %v403
        %v601 = vunpack.c.l.b16 %v404
        %v602 = vunpack.c.l.b16 %v405
        %v603 = vpack.c.b16 %v506, %v505
        %v604 = vpack.c.b16 %v508, %v507
        %v605 = vpack.c.b16 %v510, %v509
        %v606 = vpack.c.b16 %v512, %v511
        %v607 = vpack.c.b16 %v514, %v513
        %v608 = vpack.c.b16 %v516, %v515
        %v609 = vpack.c.b16 %v518, %v517
        %v610 = vpack.c.b16 %v520, %v519
        %v611 = vpack.c.b16 %v522, %v521
        %v612 = vpack.c.b16 %v524, %v523
        %v613 = vpack.c.b16 %v526, %v525
        %v614 = vpack.c.b16 %v528, %v527
        %v615 = vpack.c.b16 %v530, %v529
        %v616 = vpack.c.b16 %v532, %v531
        %v617 = vpack.c.b16 %v534, %v533
        %v618 = vpack.c.b16 %v536, %v535
        %v619 = vpack.c.b16 %v538, %v537
        %v620 = vpack.c.b16 %v540, %v539
        %v621 = vpack.c.b16 %v542, %v541
        %v622 = vpack.c.b16 %v544, %v543
        %v623 = vpack.c.b16 %v546, %v545
        %v624 = vpack.c.b16 %v548, %v547
        %v625 = vpack.c.b16 %v550, %v549
        %v626 = vpack.c.b16 %v552, %v551
        %v627 = vpack.c.b16 %v554, %v553
        %v628 = vpack.c.b16 %v556, %v555
        %v629 = vpack.c.b16 %v558, %v557
        %v630 = vpack.c.b16 %v560, %v559
        %v631 = vpack.c.b16 %v562, %v561
        %v632 = vpack.c.b16 %v564, %v563
        %v633 = vpack.c.b16 %v566, %v565
        %v634 = vpack.c.b16 %v568, %v567
        %v635 = vpack.c.b16 %v570, %v569
        %v636 = vpack.c.b16 %v572, %v571
        %v637 = vpack.c.b16 %v574, %v573
        %v638 = vpack.c.b16 %v576, %v575
        %v639 = vpack.c.b16 %v578, %v577
        %v640 = vpack.c.b16 %v580, %v579
        %v641 = vpack.c.b16 %v582, %v581
        %v642 = vpack.c.b16 %v584, %v583
        %v643 = vpack.c.b16 %v586, %v585
        %v644 = vpack.c.b16 %v588, %v587
        %v645 = vpack.c.b16 %v590, %v589
        %v646 = vpack.c.b16 %v592, %v591
        %v647 = vpack.c.b16 %v594, %v593
        %v648 = vpack.c.b16 %v596, %v595
        %v649 = vpack.c.b16 %v598, %v597
        %v650 = vpack.c.b16 %v600, %v599
        %v651 = vpack.c.b16 %v602, %v601
        %vm701 = vcmask 130048
        %v703 = vsel %vm701, %v300, 0
        %v706 = vsel %vm701, %v307, 0
        %708 = vmatpush.bf16.msra.mxu0 %v610
        %709 = vmatpush.bf16.msra.mxu0 %v609
        %710 = vmatpush.bf16.msra.mxu0 %v608
        %711 = vmatpush.bf16.msra.mxu0 %v607
        %712 = vmatpush.bf16.msra.mxu0 %v606
        %713 = vmatpush.bf16.msra.mxu0 %v605
        %714 = vmatpush.bf16.msra.mxu0 %v604
        %715 = vmatpush.bf16.msra.mxu0 %v603
        %716 = vmatmul.bf16.gmra.mxu0 %v294
        %v717 = vpop.f32.mrf.mxu0
        %v718 = vadd.f32 %v406, %v717
        %v719 = vpop.f32.mrf.mxu0
        %v720 = vadd.f32 %v406, %v719
        %721 = vmatmul.bf16.gmra.mxu0 %v301
        %v722 = vpop.f32.mrf.mxu0
        %v723 = vadd.f32 %v406, %v722
        %v724 = vpop.f32.mrf.mxu0
        %v725 = vadd.f32 %v406, %v724
        %726 = vdwg.mxu0
        %727 = vmatpush.bf16.msra.mxu0 %v618
        %728 = vmatpush.bf16.msra.mxu0 %v617
        %729 = vmatpush.bf16.msra.mxu0 %v616
        %730 = vmatpush.bf16.msra.mxu0 %v615
        %731 = vmatpush.bf16.msra.mxu0 %v614
        %732 = vmatpush.bf16.msra.mxu0 %v613
        %733 = vmatpush.bf16.msra.mxu0 %v612
        %734 = vmatpush.bf16.msra.mxu0 %v611
        %735 = vmatmul.bf16.gmra.mxu0 %v295
        %v736 = vpop.f32.mrf.mxu0
        %v737 = vadd.f32 %v718, %v736
        %v738 = vpop.f32.mrf.mxu0
        %v739 = vadd.f32 %v720, %v738
        %740 = vmatmul.bf16.gmra.mxu0 %v302
        %v741 = vpop.f32.mrf.mxu0
        %v742 = vadd.f32 %v723, %v741
        %v743 = vpop.f32.mrf.mxu0
        %v744 = vadd.f32 %v725, %v743
        %745 = vdwg.mxu0
        %746 = vmatpush.bf16.msra.mxu0 %v626
        %747 = vmatpush.bf16.msra.mxu0 %v625
        %748 = vmatpush.bf16.msra.mxu0 %v624
        %749 = vmatpush.bf16.msra.mxu0 %v623
        %750 = vmatpush.bf16.msra.mxu0 %v622
        %751 = vmatpush.bf16.msra.mxu0 %v621
        %752 = vmatpush.bf16.msra.mxu0 %v620
        %753 = vmatpush.bf16.msra.mxu0 %v619
        %754 = vmatmul.bf16.gmra.mxu0 %v296
        %v755 = vpop.f32.mrf.mxu0
        %v756 = vadd.f32 %v737, %v755
        %v757 = vpop.f32.mrf.mxu0
        %v758 = vadd.f32 %v739, %v757
        %759 = vmatmul.bf16.gmra.mxu0 %v303
        %v760 = vpop.f32.mrf.mxu0
        %v761 = vadd.f32 %v742, %v760
        %v762 = vpop.f32.mrf.mxu0
        %v763 = vadd.f32 %v744, %v762
        %764 = vdwg.mxu0
        %765 = vmatpush.bf16.msra.mxu0 %v634
        %766 = vmatpush.bf16.msra.mxu0 %v633
        %767 = vmatpush.bf16.msra.mxu0 %v632
        %768 = vmatpush.bf16.msra.mxu0 %v631
        %769 = vmatpush.bf16.msra.mxu0 %v630
        %770 = vmatpush.bf16.msra.mxu0 %v629
        %771 = vmatpush.bf16.msra.mxu0 %v628
        %772 = vmatpush.bf16.msra.mxu0 %v627
        %773 = vmatmul.bf16.gmra.mxu0 %v297
        %v774 = vpop.f32.mrf.mxu0
        %v775 = vadd.f32 %v756, %v774
        %v776 = vpop.f32.mrf.mxu0
        %v777 = vadd.f32 %v758, %v776
        %778 = vmatmul.bf16.gmra.mxu0 %v304
        %v779 = vpop.f32.mrf.mxu0
        %v780 = vadd.f32 %v761, %v779
        %v781 = vpop.f32.mrf.mxu0
        %v782 = vadd.f32 %v763, %v781
        %783 = vdwg.mxu0
        %784 = vmatpush.bf16.msra.mxu0 %v642
        %785 = vmatpush.bf16.msra.mxu0 %v641
        %786 = vmatpush.bf16.msra.mxu0 %v640
        %787 = vmatpush.bf16.msra.mxu0 %v639
        %788 = vmatpush.bf16.msra.mxu0 %v638
        %789 = vmatpush.bf16.msra.mxu0 %v637
        %790 = vmatpush.bf16.msra.mxu0 %v636
        %791 = vmatpush.bf16.msra.mxu0 %v635
        %792 = vmatmul.bf16.gmra.mxu0 %v298
        %v793 = vpop.f32.mrf.mxu0
        %v794 = vadd.f32 %v775, %v793
        %v795 = vpop.f32.mrf.mxu0
        %v796 = vadd.f32 %v777, %v795
        %797 = vmatmul.bf16.gmra.mxu0 %v305
        %v798 = vpop.f32.mrf.mxu0
        %v799 = vadd.f32 %v780, %v798
        %v800 = vpop.f32.mrf.mxu0
        %v801 = vadd.f32 %v782, %v800
        %802 = vdwg.mxu0
        %803 = vmatpush.bf16.msra.mxu0 %v650
        %804 = vmatpush.bf16.msra.mxu0 %v649
        %805 = vmatpush.bf16.msra.mxu0 %v648
        %806 = vmatpush.bf16.msra.mxu0 %v647
        %807 = vmatpush.bf16.msra.mxu0 %v646
        %808 = vmatpush.bf16.msra.mxu0 %v645
        %809 = vmatpush.bf16.msra.mxu0 %v644
        %810 = vmatpush.bf16.msra.mxu0 %v643
        %811 = vmatmul.bf16.gmra.mxu0 %v299
        %v812 = vpop.f32.mrf.mxu0
        %v813 = vadd.f32 %v794, %v812
        %v814 = vpop.f32.mrf.mxu0
        %v815 = vadd.f32 %v796, %v814
        %816 = vmatmul.bf16.gmra.mxu0 %v306
        %v817 = vpop.f32.mrf.mxu0
        %v818 = vadd.f32 %v799, %v817
        %v819 = vpop.f32.mrf.mxu0
        %v820 = vadd.f32 %v801, %v819
        %821 = vdwg.mxu0
        %822 = vmatpush.bf16.msra.mxu0 0
        %823 = vmatpush.bf16.msra.mxu0 0
        %824 = vmatpush.bf16.msra.mxu0 0
        %825 = vmatpush.bf16.msra.mxu0 0
        %826 = vmatpush.bf16.msra.mxu0 0
        %827 = vmatpush.bf16.msra.mxu0 0
        %828 = vmatpush.bf16.msra.mxu0 0
        %829 = vmatpush.bf16.msra.mxu0 %v651
        %830 = vmatmul.bf16.gmra.mxu0 %v703
        %v831 = vpop.f32.mrf.mxu0
        %v832 = vadd.f32 %v813, %v831
        %v833 = vpop.f32.mrf.mxu0
        %v834 = vadd.f32 %v815, %v833
        %835 = vmatmul.bf16.gmra.mxu0 %v706
        %v836 = vpop.f32.mrf.mxu0
        %v837 = vadd.f32 %v818, %v836
        %v838 = vpop.f32.mrf.mxu0
        %v839 = vadd.f32 %v820, %v838
        %840 = vdwg.mxu0
        %v841 = vmax.f32 %v832, 0.0
        %v842 = vmax.f32 %v834, 0.0
        %v843 = vmax.f32 %v837, 0.0
        %v844 = vmax.f32 %v839, 0.0
        %v845 = vpack.c.bf16 %v842, %v841
        %v846 = vpack.c.bf16 %v844, %v843
        %v847 = vld [vmem:[%s2] sm:$0xf]
        %v848 = vld [vmem:[%s2 + $0x4] sm:$0xf]
        %v849 = vld [vmem:[%s2 + $0x8] sm:$0xf]
        %v850 = vld [vmem:[%s2 + $0xc] sm:$0xf]
        %v851 = vld [vmem:[%s2 + $0x10] sm:$0xf]
        %v852 = vld [vmem:[%s2 + $0x14] sm:$0xf]
        %v853 = vld [vmem:[%s2 + $0x18] sm:$0xf]
        %v854 = vld [vmem:[%s2 + $0x1c] sm:$0xf]
        %v855 = vld [vmem:[%s2 + $0x20] sm:$0xf]
        %v856 = vld [vmem:[%s2 + $0x24] sm:$0xf]
        %v857 = vld [vmem:[%s2 + $0x28] sm:$0xf]
        %v858 = vld [vmem:[%s2 + $0x2c] sm:$0xf]
        %v859 = vld [vmem:[%s2 + $0x30] sm:$0xf]
        %v860 = vld [vmem:[%s2 + $0x34] sm:$0xf]
        %v861 = vld [vmem:[%s2 + $0x38] sm:$0xf]
        %v862 = vld [vmem:[%s2 + $0x3c] sm:$0xf]
        %v863 = vld [vmem:[%s4 + $0x1] ss:$0 sm:$0xff]
        %v880 = vunpack.c.l.b16 %v847
        %v881 = vunpack.c.l.b16 %v848
        %v882 = vunpack.c.l.b16 %v849
        %v883 = vunpack.c.l.b16 %v850
        %v884 = vunpack.c.l.b16 %v851
        %v885 = vunpack.c.l.b16 %v852
        %v886 = vunpack.c.l.b16 %v853
        %v887 = vunpack.c.l.b16 %v854
        %v888 = vunpack.c.l.b16 %v855
        %v889 = vunpack.c.l.b16 %v856
        %v890 = vunpack.c.l.b16 %v857
        %v891 = vunpack.c.l.b16 %v858
        %v892 = vunpack.c.l.b16 %v859
        %v893 = vunpack.c.l.b16 %v860
        %v894 = vunpack.c.l.b16 %v861
        %v895 = vunpack.c.l.b16 %v862
        %v896 = vpack.c.b16 %v881, %v880
        %v897 = vpack.c.b16 %v883, %v882
        %v898 = vpack.c.b16 %v885, %v884
        %v899 = vpack.c.b16 %v887, %v886
        %v900 = vpack.c.b16 %v889, %v888
        %v901 = vpack.c.b16 %v891, %v890
        %v902 = vpack.c.b16 %v893, %v892
        %v903 = vpack.c.b16 %v895, %v894
        %912 = vmatpush.bf16.msra.mxu0 %v903
        %913 = vmatpush.bf16.msra.mxu0 %v902
        %914 = vmatpush.bf16.msra.mxu0 %v901
        %915 = vmatpush.bf16.msra.mxu0 %v900
        %916 = vmatpush.bf16.msra.mxu0 %v899
        %917 = vmatpush.bf16.msra.mxu0 %v898
        %918 = vmatpush.bf16.msra.mxu0 %v897
        %919 = vmatpush.bf16.msra.mxu0 %v896
        %920 = vmatmul.bf16.gmra.mxu0 %v845
        %v921 = vpop.f32.mrf.mxu0
        %v922 = vadd.f32 %v863, %v921
        %v923 = vpop.f32.mrf.mxu0
        %v924 = vadd.f32 %v863, %v923
        %925 = vmatmul.bf16.gmra.mxu0 %v846
        %v926 = vpop.f32.mrf.mxu0
        %v927 = vadd.f32 %v863, %v926
        %v928 = vpop.f32.mrf.mxu0
        %v929 = vadd.f32 %v863, %v928
        %930 = vdwg.mxu0
        %v931 = vmax.f32 %v922, 0.0
        %v932 = vmax.f32 %v924, 0.0
        %v933 = vmax.f32 %v927, 0.0
        %v934 = vmax.f32 %v929, 0.0
        %v935 = vpack.c.bf16 %v932, %v931
        %v936 = vpack.c.bf16 %v934, %v933
        %s937 = scalar_lea.vmem %s2, 64
        %v938 = vld [vmem:[%s937] sm:$0xf]
        %v939 = vld [vmem:[%s937 + $0x4] sm:$0xf]
        %v940 = vld [vmem:[%s937 + $0x8] sm:$0xf]
        %v941 = vld [vmem:[%s937 + $0xc] sm:$0xf]
        %v942 = vld [vmem:[%s937 + $0x10] sm:$0xf]
        %v943 = vld [vmem:[%s937 + $0x14] sm:$0xf]
        %v944 = vld [vmem:[%s937 + $0x18] sm:$0xf]
        %v945 = vld [vmem:[%s937 + $0x1c] sm:$0xf]
        %v946 = vld [vmem:[%s937 + $0x20] sm:$0xf]
        %v947 = vld [vmem:[%s937 + $0x24] sm:$0xf]
        %v948 = vld [vmem:[%s937 + $0x28] sm:$0xf]
        %v949 = vld [vmem:[%s937 + $0x2c] sm:$0xf]
        %v950 = vld [vmem:[%s937 + $0x30] sm:$0xf]
        %v951 = vld [vmem:[%s937 + $0x34] sm:$0xf]
        %v952 = vld [vmem:[%s937 + $0x38] sm:$0xf]
        %v953 = vld [vmem:[%s937 + $0x3c] sm:$0xf]
        %v954 = vld [vmem:[%s4 + $0x2] ss:$0 sm:$0xff]
        %v971 = vunpack.c.l.b16 %v938
        %v972 = vunpack.c.l.b16 %v939
        %v973 = vunpack.c.l.b16 %v940
        %v974 = vunpack.c.l.b16 %v941
        %v975 = vunpack.c.l.b16 %v942
        %v976 = vunpack.c.l.b16 %v943
        %v977 = vunpack.c.l.b16 %v944
        %v978 = vunpack.c.l.b16 %v945
        %v979 = vunpack.c.l.b16 %v946
        %v980 = vunpack.c.l.b16 %v947
        %v981 = vunpack.c.l.b16 %v948
        %v982 = vunpack.c.l.b16 %v949
        %v983 = vunpack.c.l.b16 %v950
        %v984 = vunpack.c.l.b16 %v951
        %v985 = vunpack.c.l.b16 %v952
        %v986 = vunpack.c.l.b16 %v953
        %v987 = vpack.c.b16 %v972, %v971
        %v988 = vpack.c.b16 %v974, %v973
        %v989 = vpack.c.b16 %v976, %v975
        %v990 = vpack.c.b16 %v978, %v977
        %v991 = vpack.c.b16 %v980, %v979
        %v992 = vpack.c.b16 %v982, %v981
        %v993 = vpack.c.b16 %v984, %v983
        %v994 = vpack.c.b16 %v986, %v985
        %1003 = vmatpush.bf16.msra.mxu0 %v994
        %1004 = vmatpush.bf16.msra.mxu0 %v993
        %1005 = vmatpush.bf16.msra.mxu0 %v992
        %1006 = vmatpush.bf16.msra.mxu0 %v991
        %1007 = vmatpush.bf16.msra.mxu0 %v990
        %1008 = vmatpush.bf16.msra.mxu0 %v989
        %1009 = vmatpush.bf16.msra.mxu0 %v988
        %1010 = vmatpush.bf16.msra.mxu0 %v987
        %1011 = vmatmul.bf16.gmra.mxu0 %v935
        %v1012 = vpop.f32.mrf.mxu0
        %v1013 = vadd.f32 %v954, %v1012
        %v1014 = vpop.f32.mrf.mxu0
        %v1015 = vadd.f32 %v954, %v1014
        %1016 = vmatmul.bf16.gmra.mxu0 %v936
        %v1017 = vpop.f32.mrf.mxu0
        %v1018 = vadd.f32 %v954, %v1017
        %v1019 = vpop.f32.mrf.mxu0
        %v1020 = vadd.f32 %v954, %v1019
        %1021 = vdwg.mxu0
        %v1022 = vmax.f32 %v1013, 0.0
        %v1023 = vmax.f32 %v1015, 0.0
        %v1024 = vmax.f32 %v1018, 0.0
        %v1025 = vmax.f32 %v1020, 0.0
        %v1026 = vpack.c.bf16 %v1023, %v1022
        %v1027 = vpack.c.bf16 %v1025, %v1024
        %s1028 = scalar_lea.vmem %s2, 128
        %v1029 = vld [vmem:[%s1028] sm:$0xf]
        %v1030 = vld [vmem:[%s1028 + $0x4] sm:$0xf]
        %v1031 = vld [vmem:[%s1028 + $0x8] sm:$0xf]
        %v1032 = vld [vmem:[%s1028 + $0xc] sm:$0xf]
        %v1033 = vld [vmem:[%s1028 + $0x10] sm:$0xf]
        %v1034 = vld [vmem:[%s1028 + $0x14] sm:$0xf]
        %v1035 = vld [vmem:[%s1028 + $0x18] sm:$0xf]
        %v1036 = vld [vmem:[%s1028 + $0x1c] sm:$0xf]
        %v1037 = vld [vmem:[%s1028 + $0x20] sm:$0xf]
        %v1038 = vld [vmem:[%s1028 + $0x24] sm:$0xf]
        %v1039 = vld [vmem:[%s1028 + $0x28] sm:$0xf]
        %v1040 = vld [vmem:[%s1028 + $0x2c] sm:$0xf]
        %v1041 = vld [vmem:[%s1028 + $0x30] sm:$0xf]
        %v1042 = vld [vmem:[%s1028 + $0x34] sm:$0xf]
        %v1043 = vld [vmem:[%s1028 + $0x38] sm:$0xf]
        %v1044 = vld [vmem:[%s1028 + $0x3c] sm:$0xf]
        %v1045 = vld [vmem:[%s4 + $0x3] ss:$0 sm:$0xff]
        %v1062 = vunpack.c.l.b16 %v1029
        %v1063 = vunpack.c.l.b16 %v1030
        %v1064 = vunpack.c.l.b16 %v1031
        %v1065 = vunpack.c.l.b16 %v1032
        %v1066 = vunpack.c.l.b16 %v1033
        %v1067 = vunpack.c.l.b16 %v1034
        %v1068 = vunpack.c.l.b16 %v1035
        %v1069 = vunpack.c.l.b16 %v1036
        %v1070 = vunpack.c.l.b16 %v1037
        %v1071 = vunpack.c.l.b16 %v1038
        %v1072 = vunpack.c.l.b16 %v1039
        %v1073 = vunpack.c.l.b16 %v1040
        %v1074 = vunpack.c.l.b16 %v1041
        %v1075 = vunpack.c.l.b16 %v1042
        %v1076 = vunpack.c.l.b16 %v1043
        %v1077 = vunpack.c.l.b16 %v1044
        %v1078 = vpack.c.b16 %v1063, %v1062
        %v1079 = vpack.c.b16 %v1065, %v1064
        %v1080 = vpack.c.b16 %v1067, %v1066
        %v1081 = vpack.c.b16 %v1069, %v1068
        %v1082 = vpack.c.b16 %v1071, %v1070
        %v1083 = vpack.c.b16 %v1073, %v1072
        %v1084 = vpack.c.b16 %v1075, %v1074
        %v1085 = vpack.c.b16 %v1077, %v1076
        %1094 = vmatpush.bf16.msra.mxu0 %v1085
        %1095 = vmatpush.bf16.msra.mxu0 %v1084
        %1096 = vmatpush.bf16.msra.mxu0 %v1083
        %1097 = vmatpush.bf16.msra.mxu0 %v1082
        %1098 = vmatpush.bf16.msra.mxu0 %v1081
        %1099 = vmatpush.bf16.msra.mxu0 %v1080
        %1100 = vmatpush.bf16.msra.mxu0 %v1079
        %1101 = vmatpush.bf16.msra.mxu0 %v1078
        %1102 = vmatmul.bf16.gmra.mxu0 %v1026
        %v1103 = vpop.f32.mrf.mxu0
        %v1104 = vadd.f32 %v1045, %v1103
        %v1105 = vpop.f32.mrf.mxu0
        %v1106 = vadd.f32 %v1045, %v1105
        %1107 = vmatmul.bf16.gmra.mxu0 %v1027
        %v1108 = vpop.f32.mrf.mxu0
        %v1109 = vadd.f32 %v1045, %v1108
        %v1110 = vpop.f32.mrf.mxu0
        %v1111 = vadd.f32 %v1045, %v1110
        %1112 = vdwg.mxu0
        %v1113 = vmax.f32 %v1104, 0.0
        %v1114 = vmax.f32 %v1106, 0.0
        %v1115 = vmax.f32 %v1109, 0.0
        %v1116 = vmax.f32 %v1111, 0.0
        %v1117 = vpack.c.bf16 %v1114, %v1113
        %v1118 = vpack.c.bf16 %v1116, %v1115
        %s1119 = scalar_lea.vmem %s2, 192
        %v1120 = vld [vmem:[%s1119] sm:$0xf]
        %v1121 = vld [vmem:[%s1119 + $0x4] sm:$0xf]
        %v1122 = vld [vmem:[%s1119 + $0x8] sm:$0xf]
        %v1123 = vld [vmem:[%s1119 + $0xc] sm:$0xf]
        %v1124 = vld [vmem:[%s1119 + $0x10] sm:$0xf]
        %v1125 = vld [vmem:[%s1119 + $0x14] sm:$0xf]
        %v1126 = vld [vmem:[%s1119 + $0x18] sm:$0xf]
        %v1127 = vld [vmem:[%s1119 + $0x1c] sm:$0xf]
        %v1128 = vld [vmem:[%s1119 + $0x20] sm:$0xf]
        %v1129 = vld [vmem:[%s1119 + $0x24] sm:$0xf]
        %v1130 = vld [vmem:[%s1119 + $0x28] sm:$0xf]
        %v1131 = vld [vmem:[%s1119 + $0x2c] sm:$0xf]
        %v1132 = vld [vmem:[%s1119 + $0x30] sm:$0xf]
        %v1133 = vld [vmem:[%s1119 + $0x34] sm:$0xf]
        %v1134 = vld [vmem:[%s1119 + $0x38] sm:$0xf]
        %v1135 = vld [vmem:[%s1119 + $0x3c] sm:$0xf]
        %v1136 = vld [vmem:[%s4 + $0x4] ss:$0 sm:$0xff]
        %v1153 = vunpack.c.l.b16 %v1120
        %v1154 = vunpack.c.l.b16 %v1121
        %v1155 = vunpack.c.l.b16 %v1122
        %v1156 = vunpack.c.l.b16 %v1123
        %v1157 = vunpack.c.l.b16 %v1124
        %v1158 = vunpack.c.l.b16 %v1125
        %v1159 = vunpack.c.l.b16 %v1126
        %v1160 = vunpack.c.l.b16 %v1127
        %v1161 = vunpack.c.l.b16 %v1128
        %v1162 = vunpack.c.l.b16 %v1129
        %v1163 = vunpack.c.l.b16 %v1130
        %v1164 = vunpack.c.l.b16 %v1131
        %v1165 = vunpack.c.l.b16 %v1132
        %v1166 = vunpack.c.l.b16 %v1133
        %v1167 = vunpack.c.l.b16 %v1134
        %v1168 = vunpack.c.l.b16 %v1135
        %v1169 = vpack.c.b16 %v1154, %v1153
        %v1170 = vpack.c.b16 %v1156, %v1155
        %v1171 = vpack.c.b16 %v1158, %v1157
        %v1172 = vpack.c.b16 %v1160, %v1159
        %v1173 = vpack.c.b16 %v1162, %v1161
        %v1174 = vpack.c.b16 %v1164, %v1163
        %v1175 = vpack.c.b16 %v1166, %v1165
        %v1176 = vpack.c.b16 %v1168, %v1167
        %1185 = vmatpush.bf16.msra.mxu0 %v1176
        %1186 = vmatpush.bf16.msra.mxu0 %v1175
        %1187 = vmatpush.bf16.msra.mxu0 %v1174
        %1188 = vmatpush.bf16.msra.mxu0 %v1173
        %1189 = vmatpush.bf16.msra.mxu0 %v1172
        %1190 = vmatpush.bf16.msra.mxu0 %v1171
        %1191 = vmatpush.bf16.msra.mxu0 %v1170
        %1192 = vmatpush.bf16.msra.mxu0 %v1169
        %1193 = vmatmul.bf16.gmra.mxu0 %v1117
        %v1194 = vpop.f32.mrf.mxu0
        %v1195 = vadd.f32 %v1136, %v1194
        %v1196 = vpop.f32.mrf.mxu0
        %v1197 = vadd.f32 %v1136, %v1196
        %1198 = vmatmul.bf16.gmra.mxu0 %v1118
        %v1199 = vpop.f32.mrf.mxu0
        %v1200 = vadd.f32 %v1136, %v1199
        %v1201 = vpop.f32.mrf.mxu0
        %v1202 = vadd.f32 %v1136, %v1201
        %1203 = vdwg.mxu0
        %v1204 = vpack.c.bf16 %v1197, %v1195
        %v1205 = vpack.c.bf16 %v1202, %v1200
        %s1206 = scalar_lea.vmem %s2, 256
        %v1207 = vld [vmem:[%s1206] sm:$0xf]
        %v1208 = vld [vmem:[%s1206 + $0x4] sm:$0xf]
        %v1209 = vld [vmem:[%s1206 + $0x8] sm:$0xf]
        %v1210 = vld [vmem:[%s1206 + $0xc] sm:$0xf]
        %v1211 = vld [vmem:[%s1206 + $0x10] sm:$0xf]
        %v1212 = vld [vmem:[%s1206 + $0x14] sm:$0xf]
        %v1213 = vld [vmem:[%s1206 + $0x18] sm:$0xf]
        %v1214 = vld [vmem:[%s1206 + $0x1c] sm:$0xf]
        %v1215 = vld [vmem:[%s1206 + $0x20] sm:$0xf]
        %v1216 = vld [vmem:[%s1206 + $0x24] sm:$0xf]
        %v1217 = vld [vmem:[%s1206 + $0x28] sm:$0xf]
        %v1218 = vld [vmem:[%s1206 + $0x2c] sm:$0xf]
        %v1219 = vld [vmem:[%s1206 + $0x30] sm:$0xf]
        %v1220 = vld [vmem:[%s1206 + $0x34] sm:$0xf]
        %v1221 = vld [vmem:[%s1206 + $0x38] sm:$0xf]
        %v1222 = vld [vmem:[%s1206 + $0x3c] sm:$0xf]
        %v1223 = vld [vmem:[%s4 + $0x5] ss:$0 sm:$0xff]
        %v1240 = vunpack.c.l.b16 %v1207
        %v1241 = vunpack.c.l.b16 %v1208
        %v1242 = vunpack.c.l.b16 %v1209
        %v1243 = vunpack.c.l.b16 %v1210
        %v1244 = vunpack.c.l.b16 %v1211
        %v1245 = vunpack.c.l.b16 %v1212
        %v1246 = vunpack.c.l.b16 %v1213
        %v1247 = vunpack.c.l.b16 %v1214
        %v1248 = vunpack.c.l.b16 %v1215
        %v1249 = vunpack.c.l.b16 %v1216
        %v1250 = vunpack.c.l.b16 %v1217
        %v1251 = vunpack.c.l.b16 %v1218
        %v1252 = vunpack.c.l.b16 %v1219
        %v1253 = vunpack.c.l.b16 %v1220
        %v1254 = vunpack.c.l.b16 %v1221
        %v1255 = vunpack.c.l.b16 %v1222
        %v1256 = vpack.c.b16 %v1241, %v1240
        %v1257 = vpack.c.b16 %v1243, %v1242
        %v1258 = vpack.c.b16 %v1245, %v1244
        %v1259 = vpack.c.b16 %v1247, %v1246
        %v1260 = vpack.c.b16 %v1249, %v1248
        %v1261 = vpack.c.b16 %v1251, %v1250
        %v1262 = vpack.c.b16 %v1253, %v1252
        %v1263 = vpack.c.b16 %v1255, %v1254
        %1272 = vmatpush.bf16.msra.mxu0 %v1263
        %1273 = vmatpush.bf16.msra.mxu0 %v1262
        %1274 = vmatpush.bf16.msra.mxu0 %v1261
        %1275 = vmatpush.bf16.msra.mxu0 %v1260
        %1276 = vmatpush.bf16.msra.mxu0 %v1259
        %1277 = vmatpush.bf16.msra.mxu0 %v1258
        %1278 = vmatpush.bf16.msra.mxu0 %v1257
        %1279 = vmatpush.bf16.msra.mxu0 %v1256
        %1280 = vmatmul.bf16.gmra.mxu0 %v1204
        %v1281 = vpop.f32.mrf.mxu0
        %v1282 = vadd.f32 %v1223, %v1281
        %v1283 = vpop.f32.mrf.mxu0
        %v1284 = vadd.f32 %v1223, %v1283
        %1285 = vmatmul.bf16.gmra.mxu0 %v1205
        %v1286 = vpop.f32.mrf.mxu0
        %v1287 = vadd.f32 %v1223, %v1286
        %v1288 = vpop.f32.mrf.mxu0
        %v1289 = vadd.f32 %v1223, %v1288
        %1290 = vdwg.mxu0
        %v1291 = vmax.f32 %v1282, 0.0
        %v1292 = vmax.f32 %v1284, 0.0
        %v1293 = vmax.f32 %v1287, 0.0
        %v1294 = vmax.f32 %v1289, 0.0
        %v1295 = vpack.c.bf16 %v1292, %v1291
        %v1296 = vpack.c.bf16 %v1294, %v1293
        %s1297 = scalar_lea.vmem %s2, 320
        %v1298 = vld [vmem:[%s1297] sm:$0xf]
        %v1299 = vld [vmem:[%s1297 + $0x4] sm:$0xf]
        %v1300 = vld [vmem:[%s1297 + $0x8] sm:$0xf]
        %v1301 = vld [vmem:[%s1297 + $0xc] sm:$0xf]
        %v1302 = vld [vmem:[%s1297 + $0x10] sm:$0xf]
        %v1303 = vld [vmem:[%s1297 + $0x14] sm:$0xf]
        %v1304 = vld [vmem:[%s1297 + $0x18] sm:$0xf]
        %v1305 = vld [vmem:[%s1297 + $0x1c] sm:$0xf]
        %v1306 = vld [vmem:[%s1297 + $0x20] sm:$0xf]
        %v1307 = vld [vmem:[%s1297 + $0x24] sm:$0xf]
        %v1308 = vld [vmem:[%s1297 + $0x28] sm:$0xf]
        %v1309 = vld [vmem:[%s1297 + $0x2c] sm:$0xf]
        %v1310 = vld [vmem:[%s1297 + $0x30] sm:$0xf]
        %v1311 = vld [vmem:[%s1297 + $0x34] sm:$0xf]
        %v1312 = vld [vmem:[%s1297 + $0x38] sm:$0xf]
        %v1313 = vld [vmem:[%s1297 + $0x3c] sm:$0xf]
        %v1314 = vld [vmem:[%s4 + $0x6] ss:$0 sm:$0xff]
        %v1331 = vunpack.c.l.b16 %v1298
        %v1332 = vunpack.c.l.b16 %v1299
        %v1333 = vunpack.c.l.b16 %v1300
        %v1334 = vunpack.c.l.b16 %v1301
        %v1335 = vunpack.c.l.b16 %v1302
        %v1336 = vunpack.c.l.b16 %v1303
        %v1337 = vunpack.c.l.b16 %v1304
        %v1338 = vunpack.c.l.b16 %v1305
        %v1339 = vunpack.c.l.b16 %v1306
        %v1340 = vunpack.c.l.b16 %v1307
        %v1341 = vunpack.c.l.b16 %v1308
        %v1342 = vunpack.c.l.b16 %v1309
        %v1343 = vunpack.c.l.b16 %v1310
        %v1344 = vunpack.c.l.b16 %v1311
        %v1345 = vunpack.c.l.b16 %v1312
        %v1346 = vunpack.c.l.b16 %v1313
        %v1347 = vpack.c.b16 %v1332, %v1331
        %v1348 = vpack.c.b16 %v1334, %v1333
        %v1349 = vpack.c.b16 %v1336, %v1335
        %v1350 = vpack.c.b16 %v1338, %v1337
        %v1351 = vpack.c.b16 %v1340, %v1339
        %v1352 = vpack.c.b16 %v1342, %v1341
        %v1353 = vpack.c.b16 %v1344, %v1343
        %v1354 = vpack.c.b16 %v1346, %v1345
        %1363 = vmatpush.bf16.msra.mxu0 %v1354
        %1364 = vmatpush.bf16.msra.mxu0 %v1353
        %1365 = vmatpush.bf16.msra.mxu0 %v1352
        %1366 = vmatpush.bf16.msra.mxu0 %v1351
        %1367 = vmatpush.bf16.msra.mxu0 %v1350
        %1368 = vmatpush.bf16.msra.mxu0 %v1349
        %1369 = vmatpush.bf16.msra.mxu0 %v1348
        %1370 = vmatpush.bf16.msra.mxu0 %v1347
        %1371 = vmatmul.bf16.gmra.mxu0 %v1295
        %v1372 = vpop.f32.mrf.mxu0
        %v1373 = vadd.f32 %v1314, %v1372
        %v1374 = vpop.f32.mrf.mxu0
        %v1375 = vadd.f32 %v1314, %v1374
        %1376 = vmatmul.bf16.gmra.mxu0 %v1296
        %v1377 = vpop.f32.mrf.mxu0
        %v1378 = vadd.f32 %v1314, %v1377
        %v1379 = vpop.f32.mrf.mxu0
        %v1380 = vadd.f32 %v1314, %v1379
        %1381 = vdwg.mxu0
        %v1382 = vmax.f32 %v1373, 0.0
        %v1383 = vmax.f32 %v1375, 0.0
        %v1384 = vmax.f32 %v1378, 0.0
        %v1385 = vmax.f32 %v1380, 0.0
        %v1386 = vpack.c.bf16 %v1383, %v1382
        %v1387 = vpack.c.bf16 %v1385, %v1384
        %s1388 = scalar_lea.vmem %s2, 384
        %v1389 = vld [vmem:[%s1388] sm:$0xf]
        %v1390 = vld [vmem:[%s1388 + $0x4] sm:$0xf]
        %v1391 = vld [vmem:[%s1388 + $0x8] sm:$0xf]
        %v1392 = vld [vmem:[%s1388 + $0xc] sm:$0xf]
        %v1393 = vld [vmem:[%s1388 + $0x10] sm:$0xf]
        %v1394 = vld [vmem:[%s1388 + $0x14] sm:$0xf]
        %v1395 = vld [vmem:[%s1388 + $0x18] sm:$0xf]
        %v1396 = vld [vmem:[%s1388 + $0x1c] sm:$0xf]
        %v1397 = vld [vmem:[%s1388 + $0x20] sm:$0xf]
        %v1398 = vld [vmem:[%s1388 + $0x24] sm:$0xf]
        %v1399 = vld [vmem:[%s1388 + $0x28] sm:$0xf]
        %v1400 = vld [vmem:[%s1388 + $0x2c] sm:$0xf]
        %v1401 = vld [vmem:[%s1388 + $0x30] sm:$0xf]
        %v1402 = vld [vmem:[%s1388 + $0x34] sm:$0xf]
        %v1403 = vld [vmem:[%s1388 + $0x38] sm:$0xf]
        %v1404 = vld [vmem:[%s1388 + $0x3c] sm:$0xf]
        %v1405 = vld [vmem:[%s4 + $0x7] ss:$0 sm:$0xff]
        %v1422 = vunpack.c.l.b16 %v1389
        %v1423 = vunpack.c.l.b16 %v1390
        %v1424 = vunpack.c.l.b16 %v1391
        %v1425 = vunpack.c.l.b16 %v1392
        %v1426 = vunpack.c.l.b16 %v1393
        %v1427 = vunpack.c.l.b16 %v1394
        %v1428 = vunpack.c.l.b16 %v1395
        %v1429 = vunpack.c.l.b16 %v1396
        %v1430 = vunpack.c.l.b16 %v1397
        %v1431 = vunpack.c.l.b16 %v1398
        %v1432 = vunpack.c.l.b16 %v1399
        %v1433 = vunpack.c.l.b16 %v1400
        %v1434 = vunpack.c.l.b16 %v1401
        %v1435 = vunpack.c.l.b16 %v1402
        %v1436 = vunpack.c.l.b16 %v1403
        %v1437 = vunpack.c.l.b16 %v1404
        %v1438 = vpack.c.b16 %v1423, %v1422
        %v1439 = vpack.c.b16 %v1425, %v1424
        %v1440 = vpack.c.b16 %v1427, %v1426
        %v1441 = vpack.c.b16 %v1429, %v1428
        %v1442 = vpack.c.b16 %v1431, %v1430
        %v1443 = vpack.c.b16 %v1433, %v1432
        %v1444 = vpack.c.b16 %v1435, %v1434
        %v1445 = vpack.c.b16 %v1437, %v1436
        %1454 = vmatpush.bf16.msra.mxu0 %v1445
        %1455 = vmatpush.bf16.msra.mxu0 %v1444
        %1456 = vmatpush.bf16.msra.mxu0 %v1443
        %1457 = vmatpush.bf16.msra.mxu0 %v1442
        %1458 = vmatpush.bf16.msra.mxu0 %v1441
        %1459 = vmatpush.bf16.msra.mxu0 %v1440
        %1460 = vmatpush.bf16.msra.mxu0 %v1439
        %1461 = vmatpush.bf16.msra.mxu0 %v1438
        %1462 = vmatmul.bf16.gmra.mxu0 %v1386
        %v1463 = vpop.f32.mrf.mxu0
        %v1464 = vadd.f32 %v1405, %v1463
        %v1465 = vpop.f32.mrf.mxu0
        %v1466 = vadd.f32 %v1405, %v1465
        %1467 = vmatmul.bf16.gmra.mxu0 %v1387
        %v1468 = vpop.f32.mrf.mxu0
        %v1469 = vadd.f32 %v1405, %v1468
        %v1470 = vpop.f32.mrf.mxu0
        %v1471 = vadd.f32 %v1405, %v1470
        %1472 = vdwg.mxu0
        %v1473 = vmax.f32 %v1464, 0.0
        %v1474 = vmax.f32 %v1466, 0.0
        %v1475 = vmax.f32 %v1469, 0.0
        %v1476 = vmax.f32 %v1471, 0.0
        %v1477 = vpack.c.bf16 %v1474, %v1473
        %v1478 = vpack.c.bf16 %v1476, %v1475
        %s1479 = scalar_lea.vmem %s2, 448
        %v1480 = vld [vmem:[%s1479] sm:$0xf]
        %v1481 = vld [vmem:[%s1479 + $0x4] sm:$0xf]
        %v1482 = vld [vmem:[%s1479 + $0x8] sm:$0xf]
        %v1483 = vld [vmem:[%s1479 + $0xc] sm:$0xf]
        %v1484 = vld [vmem:[%s1479 + $0x10] sm:$0xf]
        %v1485 = vld [vmem:[%s1479 + $0x14] sm:$0xf]
        %v1486 = vld [vmem:[%s1479 + $0x18] sm:$0xf]
        %v1487 = vld [vmem:[%s1479 + $0x1c] sm:$0xf]
        %v1488 = vld [vmem:[%s1479 + $0x20] sm:$0xf]
        %v1489 = vld [vmem:[%s1479 + $0x24] sm:$0xf]
        %v1490 = vld [vmem:[%s1479 + $0x28] sm:$0xf]
        %v1491 = vld [vmem:[%s1479 + $0x2c] sm:$0xf]
        %v1492 = vld [vmem:[%s1479 + $0x30] sm:$0xf]
        %v1493 = vld [vmem:[%s1479 + $0x34] sm:$0xf]
        %v1494 = vld [vmem:[%s1479 + $0x38] sm:$0xf]
        %v1495 = vld [vmem:[%s1479 + $0x3c] sm:$0xf]
        %v1496 = vld [vmem:[%s4 + $0x38] ss:$0 sm:$0xff]
        %v1513 = vunpack.c.l.b16 %v1480
        %v1514 = vunpack.c.l.b16 %v1481
        %v1515 = vunpack.c.l.b16 %v1482
        %v1516 = vunpack.c.l.b16 %v1483
        %v1517 = vunpack.c.l.b16 %v1484
        %v1518 = vunpack.c.l.b16 %v1485
        %v1519 = vunpack.c.l.b16 %v1486
        %v1520 = vunpack.c.l.b16 %v1487
        %v1521 = vunpack.c.l.b16 %v1488
        %v1522 = vunpack.c.l.b16 %v1489
        %v1523 = vunpack.c.l.b16 %v1490
        %v1524 = vunpack.c.l.b16 %v1491
        %v1525 = vunpack.c.l.b16 %v1492
        %v1526 = vunpack.c.l.b16 %v1493
        %v1527 = vunpack.c.l.b16 %v1494
        %v1528 = vunpack.c.l.b16 %v1495
        %v1529 = vpack.c.b16 %v1514, %v1513
        %v1530 = vpack.c.b16 %v1516, %v1515
        %v1531 = vpack.c.b16 %v1518, %v1517
        %v1532 = vpack.c.b16 %v1520, %v1519
        %v1533 = vpack.c.b16 %v1522, %v1521
        %v1534 = vpack.c.b16 %v1524, %v1523
        %v1535 = vpack.c.b16 %v1526, %v1525
        %v1536 = vpack.c.b16 %v1528, %v1527
        %1545 = vmatpush.bf16.msra.mxu0 %v1536
        %1546 = vmatpush.bf16.msra.mxu0 %v1535
        %1547 = vmatpush.bf16.msra.mxu0 %v1534
        %1548 = vmatpush.bf16.msra.mxu0 %v1533
        %1549 = vmatpush.bf16.msra.mxu0 %v1532
        %1550 = vmatpush.bf16.msra.mxu0 %v1531
        %1551 = vmatpush.bf16.msra.mxu0 %v1530
        %1552 = vmatpush.bf16.msra.mxu0 %v1529
        %1553 = vmatmul.bf16.gmra.mxu0 %v1477
        %v1554 = vpop.f32.mrf.mxu0
        %v1555 = vadd.f32 %v1496, %v1554
        %v1556 = vpop.f32.mrf.mxu0
        %v1557 = vadd.f32 %v1496, %v1556
        %1558 = vmatmul.bf16.gmra.mxu0 %v1478
        %v1559 = vpop.f32.mrf.mxu0
        %v1560 = vadd.f32 %v1496, %v1559
        %v1561 = vpop.f32.mrf.mxu0
        %v1562 = vadd.f32 %v1496, %v1561
        %1563 = vdwg.mxu0
        %v1564 = vpack.c.bf16 %v1557, %v1555
        %v1565 = vpack.c.bf16 %v1562, %v1560
        %v1566 = vld [vmem:[%s3] sm:$0xff]
        %v1567 = vld [vmem:[%s3 + $0x8] sm:$0xff]
        %v1568 = vld [vmem:[%s3 + $0x10] sm:$0xff]
        %v1569 = vld [vmem:[%s3 + $0x18] sm:$0xf]
        %v1570 = vld [vmem:[%s3 + $0x1c] sm:$0xff]
        %v1571 = vld [vmem:[%s3 + $0x24] sm:$0xff]
        %v1572 = vld [vmem:[%s3 + $0x2c] sm:$0xff]
        %v1573 = vld [vmem:[%s3 + $0x34] sm:$0xf]
        %v1574 = vld [vmem:[%s3 + $0x38] sm:$0xff]
        %v1575 = vld [vmem:[%s3 + $0x40] sm:$0xff]
        %v1576 = vld [vmem:[%s3 + $0x48] sm:$0xff]
        %v1577 = vld [vmem:[%s3 + $0x50] sm:$0xf]
        %v1578 = vld [vmem:[%s3 + $0x54] sm:$0xff]
        %v1579 = vld [vmem:[%s3 + $0x5c] sm:$0xff]
        %v1580 = vld [vmem:[%s3 + $0x64] sm:$0xff]
        %v1581 = vld [vmem:[%s3 + $0x6c] sm:$0xf]
        %v1582 = vld [vmem:[%s3 + $0x70] sm:$0xff]
        %v1583 = vld [vmem:[%s3 + $0x78] sm:$0xff]
        %v1584 = vld [vmem:[%s3 + $0x80] sm:$0xff]
        %v1585 = vld [vmem:[%s3 + $0x88] sm:$0xf]
        %v1586 = vld [vmem:[%s3 + $0x8c] sm:$0xff]
        %v1587 = vld [vmem:[%s3 + $0x94] sm:$0xff]
        %v1588 = vld [vmem:[%s3 + $0x9c] sm:$0xff]
        %v1589 = vld [vmem:[%s3 + $0xa4] sm:$0xf]
        %v1590 = vld [vmem:[%s3 + $0xa8] sm:$0xff]
        %v1591 = vld [vmem:[%s3 + $0xb0] sm:$0xff]
        %v1592 = vld [vmem:[%s3 + $0xb8] sm:$0xff]
        %v1593 = vld [vmem:[%s3 + $0xc0] sm:$0xf]
        %v1594 = vld [vmem:[%s3 + $0xc4] sm:$0xff]
        %v1595 = vld [vmem:[%s3 + $0xcc] sm:$0xff]
        %v1596 = vld [vmem:[%s3 + $0xd4] sm:$0xff]
        %v1597 = vld [vmem:[%s3 + $0xdc] sm:$0xf]
        %v1598 = vld [vmem:[%s3 + $0xe0] sm:$0xff]
        %v1599 = vld [vmem:[%s3 + $0xe8] sm:$0xff]
        %v1600 = vld [vmem:[%s3 + $0xf0] sm:$0xff]
        %v1601 = vld [vmem:[%s3 + $0xf8] sm:$0xf]
        %v1602 = vld [vmem:[%s3 + $0xfc] sm:$0xff]
        %v1603 = vld [vmem:[%s3 + $0x104] sm:$0xff]
        %v1604 = vld [vmem:[%s3 + $0x10c] sm:$0xff]
        %v1605 = vld [vmem:[%s3 + $0x114] sm:$0xf]
        %v1606 = vld [vmem:[%s3 + $0x118] sm:$0xff]
        %v1607 = vld [vmem:[%s3 + $0x120] sm:$0xff]
        %v1608 = vld [vmem:[%s3 + $0x128] sm:$0xff]
        %v1609 = vld [vmem:[%s3 + $0x130] sm:$0xf]
        %v1610 = vld [vmem:[%s3 + $0x134] sm:$0xff]
        %v1611 = vld [vmem:[%s3 + $0x13c] sm:$0xff]
        %v1612 = vld [vmem:[%s3 + $0x144] sm:$0xff]
        %v1613 = vld [vmem:[%s3 + $0x14c] sm:$0xf]
        %v1614 = vld [vmem:[%s3 + $0x150] sm:$0xff]
        %v1615 = vld [vmem:[%s3 + $0x158] sm:$0xff]
        %v1616 = vld [vmem:[%s3 + $0x160] sm:$0xff]
        %v1617 = vld [vmem:[%s3 + $0x168] sm:$0xf]
        %v1618 = vld [vmem:[%s3 + $0x16c] sm:$0xff]
        %v1619 = vld [vmem:[%s3 + $0x174] sm:$0xff]
        %v1620 = vld [vmem:[%s3 + $0x17c] sm:$0xff]
        %v1621 = vld [vmem:[%s3 + $0x184] sm:$0xf]
        %v1622 = vld [vmem:[%s3 + $0x188] sm:$0xff]
        %v1623 = vld [vmem:[%s3 + $0x190] sm:$0xff]
        %v1624 = vld [vmem:[%s3 + $0x198] sm:$0xff]
        %v1625 = vld [vmem:[%s3 + $0x1a0] sm:$0xf]
        %v1626 = vld [vmem:[%s3 + $0x1a4] sm:$0xff]
        %v1627 = vld [vmem:[%s3 + $0x1ac] sm:$0xff]
        %v1628 = vld [vmem:[%s3 + $0x1b4] sm:$0xff]
        %v1629 = vld [vmem:[%s3 + $0x1bc] sm:$0xf]
        %s1630 = scalar_lea.vmem %s4, 57
        %v1631 = vld [vmem:[%s1630] ss:$8 sm:$0xf]
        %v1632 = vld [vmem:[%s1630] ss:$8 sm:$0x70]
        %v1633 = vor.u32 %v1631, %v1632
        %v1635 = vperm.slane %v1633, 0
        %v1636 = vperm.slane %v1633, 1
        %v1637 = vperm.slane %v1633, 2
        %v1638 = vperm.slane %v1633, 3
        %v1639 = vperm.slane %v1633, 4
        %v1640 = vperm.slane %v1633, 5
        %v1641 = vperm.slane %v1633, 6
        %v1713 = vunpack.c.l.b16 %v1566
        %v1714 = vunpack.c.h.b16 %v1566
        %v1715 = vunpack.c.l.b16 %v1567
        %v1716 = vunpack.c.h.b16 %v1567
        %v1717 = vunpack.c.l.b16 %v1568
        %v1718 = vunpack.c.h.b16 %v1568
        %v1719 = vunpack.c.l.b16 %v1569
        %v1720 = vunpack.c.l.b16 %v1570
        %v1721 = vunpack.c.h.b16 %v1570
        %v1722 = vunpack.c.l.b16 %v1571
        %v1723 = vunpack.c.h.b16 %v1571
        %v1724 = vunpack.c.l.b16 %v1572
        %v1725 = vunpack.c.h.b16 %v1572
        %v1726 = vunpack.c.l.b16 %v1573
        %v1727 = vunpack.c.l.b16 %v1574
        %v1728 = vunpack.c.h.b16 %v1574
        %v1729 = vunpack.c.l.b16 %v1575
        %v1730 = vunpack.c.h.b16 %v1575
        %v1731 = vunpack.c.l.b16 %v1576
        %v1732 = vunpack.c.h.b16 %v1576
        %v1733 = vunpack.c.l.b16 %v1577
        %v1734 = vunpack.c.l.b16 %v1578
        %v1735 = vunpack.c.h.b16 %v1578
        %v1736 = vunpack.c.l.b16 %v1579
        %v1737 = vunpack.c.h.b16 %v1579
        %v1738 = vunpack.c.l.b16 %v1580
        %v1739 = vunpack.c.h.b16 %v1580
        %v1740 = vunpack.c.l.b16 %v1581
        %v1741 = vunpack.c.l.b16 %v1582
        %v1742 = vunpack.c.h.b16 %v1582
        %v1743 = vunpack.c.l.b16 %v1583
        %v1744 = vunpack.c.h.b16 %v1583
        %v1745 = vunpack.c.l.b16 %v1584
        %v1746 = vunpack.c.h.b16 %v1584
        %v1747 = vunpack.c.l.b16 %v1585
        %v1748 = vunpack.c.l.b16 %v1586
        %v1749 = vunpack.c.h.b16 %v1586
        %v1750 = vunpack.c.l.b16 %v1587
        %v1751 = vunpack.c.h.b16 %v1587
        %v1752 = vunpack.c.l.b16 %v1588
        %v1753 = vunpack.c.h.b16 %v1588
        %v1754 = vunpack.c.l.b16 %v1589
        %v1755 = vunpack.c.l.b16 %v1590
        %v1756 = vunpack.c.h.b16 %v1590
        %v1757 = vunpack.c.l.b16 %v1591
        %v1758 = vunpack.c.h.b16 %v1591
        %v1759 = vunpack.c.l.b16 %v1592
        %v1760 = vunpack.c.h.b16 %v1592
        %v1761 = vunpack.c.l.b16 %v1593
        %v1762 = vunpack.c.l.b16 %v1594
        %v1763 = vunpack.c.h.b16 %v1594
        %v1764 = vunpack.c.l.b16 %v1595
        %v1765 = vunpack.c.h.b16 %v1595
        %v1766 = vunpack.c.l.b16 %v1596
        %v1767 = vunpack.c.h.b16 %v1596
        %v1768 = vunpack.c.l.b16 %v1597
        %v1769 = vunpack.c.l.b16 %v1598
        %v1770 = vunpack.c.h.b16 %v1598
        %v1771 = vunpack.c.l.b16 %v1599
        %v1772 = vunpack.c.h.b16 %v1599
        %v1773 = vunpack.c.l.b16 %v1600
        %v1774 = vunpack.c.h.b16 %v1600
        %v1775 = vunpack.c.l.b16 %v1601
        %v1776 = vunpack.c.l.b16 %v1602
        %v1777 = vunpack.c.h.b16 %v1602
        %v1778 = vunpack.c.l.b16 %v1603
        %v1779 = vunpack.c.h.b16 %v1603
        %v1780 = vunpack.c.l.b16 %v1604
        %v1781 = vunpack.c.h.b16 %v1604
        %v1782 = vunpack.c.l.b16 %v1605
        %v1783 = vunpack.c.l.b16 %v1606
        %v1784 = vunpack.c.h.b16 %v1606
        %v1785 = vunpack.c.l.b16 %v1607
        %v1786 = vunpack.c.h.b16 %v1607
        %v1787 = vunpack.c.l.b16 %v1608
        %v1788 = vunpack.c.h.b16 %v1608
        %v1789 = vunpack.c.l.b16 %v1609
        %v1790 = vunpack.c.l.b16 %v1610
        %v1791 = vunpack.c.h.b16 %v1610
        %v1792 = vunpack.c.l.b16 %v1611
        %v1793 = vunpack.c.h.b16 %v1611
        %v1794 = vunpack.c.l.b16 %v1612
        %v1795 = vunpack.c.h.b16 %v1612
        %v1796 = vunpack.c.l.b16 %v1613
        %v1797 = vunpack.c.l.b16 %v1614
        %v1798 = vunpack.c.h.b16 %v1614
        %v1799 = vunpack.c.l.b16 %v1615
        %v1800 = vunpack.c.h.b16 %v1615
        %v1801 = vunpack.c.l.b16 %v1616
        %v1802 = vunpack.c.h.b16 %v1616
        %v1803 = vunpack.c.l.b16 %v1617
        %v1804 = vunpack.c.l.b16 %v1618
        %v1805 = vunpack.c.h.b16 %v1618
        %v1806 = vunpack.c.l.b16 %v1619
        %v1807 = vunpack.c.h.b16 %v1619
        %v1808 = vunpack.c.l.b16 %v1620
        %v1809 = vunpack.c.h.b16 %v1620
        %v1810 = vunpack.c.l.b16 %v1621
        %v1811 = vunpack.c.l.b16 %v1622
        %v1812 = vunpack.c.h.b16 %v1622
        %v1813 = vunpack.c.l.b16 %v1623
        %v1814 = vunpack.c.h.b16 %v1623
        %v1815 = vunpack.c.l.b16 %v1624
        %v1816 = vunpack.c.h.b16 %v1624
        %v1817 = vunpack.c.l.b16 %v1625
        %v1818 = vunpack.c.l.b16 %v1626
        %v1819 = vunpack.c.h.b16 %v1626
        %v1820 = vunpack.c.l.b16 %v1627
        %v1821 = vunpack.c.h.b16 %v1627
        %v1822 = vunpack.c.l.b16 %v1628
        %v1823 = vunpack.c.h.b16 %v1628
        %v1824 = vunpack.c.l.b16 %v1629
        %v1825 = vpack.c.b16 %v1720, %v1713
        %v1826 = vpack.c.b16 %v1721, %v1714
        %v1827 = vpack.c.b16 %v1722, %v1715
        %v1828 = vpack.c.b16 %v1723, %v1716
        %v1829 = vpack.c.b16 %v1724, %v1717
        %v1830 = vpack.c.b16 %v1725, %v1718
        %v1831 = vpack.c.b16 %v1726, %v1719
        %v1832 = vpack.c.b16 %v1734, %v1727
        %v1833 = vpack.c.b16 %v1735, %v1728
        %v1834 = vpack.c.b16 %v1736, %v1729
        %v1835 = vpack.c.b16 %v1737, %v1730
        %v1836 = vpack.c.b16 %v1738, %v1731
        %v1837 = vpack.c.b16 %v1739, %v1732
        %v1838 = vpack.c.b16 %v1740, %v1733
        %v1839 = vpack.c.b16 %v1748, %v1741
        %v1840 = vpack.c.b16 %v1749, %v1742
        %v1841 = vpack.c.b16 %v1750, %v1743
        %v1842 = vpack.c.b16 %v1751, %v1744
        %v1843 = vpack.c.b16 %v1752, %v1745
        %v1844 = vpack.c.b16 %v1753, %v1746
        %v1845 = vpack.c.b16 %v1754, %v1747
        %v1846 = vpack.c.b16 %v1762, %v1755
        %v1847 = vpack.c.b16 %v1763, %v1756
        %v1848 = vpack.c.b16 %v1764, %v1757
        %v1849 = vpack.c.b16 %v1765, %v1758
        %v1850 = vpack.c.b16 %v1766, %v1759
        %v1851 = vpack.c.b16 %v1767, %v1760
        %v1852 = vpack.c.b16 %v1768, %v1761
        %v1853 = vpack.c.b16 %v1776, %v1769
        %v1854 = vpack.c.b16 %v1777, %v1770
        %v1855 = vpack.c.b16 %v1778, %v1771
        %v1856 = vpack.c.b16 %v1779, %v1772
        %v1857 = vpack.c.b16 %v1780, %v1773
        %v1858 = vpack.c.b16 %v1781, %v1774
        %v1859 = vpack.c.b16 %v1782, %v1775
        %v1860 = vpack.c.b16 %v1790, %v1783
        %v1861 = vpack.c.b16 %v1791, %v1784
        %v1862 = vpack.c.b16 %v1792, %v1785
        %v1863 = vpack.c.b16 %v1793, %v1786
        %v1864 = vpack.c.b16 %v1794, %v1787
        %v1865 = vpack.c.b16 %v1795, %v1788
        %v1866 = vpack.c.b16 %v1796, %v1789
        %v1867 = vpack.c.b16 %v1804, %v1797
        %v1868 = vpack.c.b16 %v1805, %v1798
        %v1869 = vpack.c.b16 %v1806, %v1799
        %v1870 = vpack.c.b16 %v1807, %v1800
        %v1871 = vpack.c.b16 %v1808, %v1801
        %v1872 = vpack.c.b16 %v1809, %v1802
        %v1873 = vpack.c.b16 %v1810, %v1803
        %v1874 = vpack.c.b16 %v1818, %v1811
        %v1875 = vpack.c.b16 %v1819, %v1812
        %v1876 = vpack.c.b16 %v1820, %v1813
        %v1877 = vpack.c.b16 %v1821, %v1814
        %v1878 = vpack.c.b16 %v1822, %v1815
        %v1879 = vpack.c.b16 %v1823, %v1816
        %v1880 = vpack.c.b16 %v1824, %v1817
        %1937 = vmatpush.bf16.msra.mxu0 %v1874
        %1938 = vmatpush.bf16.msra.mxu0 %v1867
        %1939 = vmatpush.bf16.msra.mxu0 %v1860
        %1940 = vmatpush.bf16.msra.mxu0 %v1853
        %1941 = vmatpush.bf16.msra.mxu0 %v1846
        %1942 = vmatpush.bf16.msra.mxu0 %v1839
        %1943 = vmatpush.bf16.msra.mxu0 %v1832
        %1944 = vmatpush.bf16.msra.mxu0 %v1825
        %1945 = vmatmul.bf16.gmra.mxu0 %v1564
        %v1946 = vpop.f32.mrf.mxu0
        %v1947 = vadd.f32 %v1635, %v1946
        %v1948 = vpop.f32.mrf.mxu0
        %v1949 = vadd.f32 %v1635, %v1948
        %1950 = vmatmul.bf16.gmra.mxu0 %v1565
        %v1951 = vpop.f32.mrf.mxu0
        %v1952 = vadd.f32 %v1635, %v1951
        %v1953 = vpop.f32.mrf.mxu0
        %v1954 = vadd.f32 %v1635, %v1953
        %1955 = vdwg.mxu0
        %1956 = vmatpush.bf16.msra.mxu0 %v1875
        %1957 = vmatpush.bf16.msra.mxu0 %v1868
        %1958 = vmatpush.bf16.msra.mxu0 %v1861
        %1959 = vmatpush.bf16.msra.mxu0 %v1854
        %1960 = vmatpush.bf16.msra.mxu0 %v1847
        %1961 = vmatpush.bf16.msra.mxu0 %v1840
        %1962 = vmatpush.bf16.msra.mxu0 %v1833
        %1963 = vmatpush.bf16.msra.mxu0 %v1826
        %1964 = vmatmul.bf16.gmra.mxu0 %v1564
        %v1965 = vpop.f32.mrf.mxu0
        %v1966 = vadd.f32 %v1636, %v1965
        %v1967 = vpop.f32.mrf.mxu0
        %v1968 = vadd.f32 %v1636, %v1967
        %1969 = vmatmul.bf16.gmra.mxu0 %v1565
        %v1970 = vpop.f32.mrf.mxu0
        %v1971 = vadd.f32 %v1636, %v1970
        %v1972 = vpop.f32.mrf.mxu0
        %v1973 = vadd.f32 %v1636, %v1972
        %1974 = vdwg.mxu0
        %1975 = vmatpush.bf16.msra.mxu0 %v1876
        %1976 = vmatpush.bf16.msra.mxu0 %v1869
        %1977 = vmatpush.bf16.msra.mxu0 %v1862
        %1978 = vmatpush.bf16.msra.mxu0 %v1855
        %1979 = vmatpush.bf16.msra.mxu0 %v1848
        %1980 = vmatpush.bf16.msra.mxu0 %v1841
        %1981 = vmatpush.bf16.msra.mxu0 %v1834
        %1982 = vmatpush.bf16.msra.mxu0 %v1827
        %1983 = vmatmul.bf16.gmra.mxu0 %v1564
        %v1984 = vpop.f32.mrf.mxu0
        %v1985 = vadd.f32 %v1637, %v1984
        %v1986 = vpop.f32.mrf.mxu0
        %v1987 = vadd.f32 %v1637, %v1986
        %1988 = vmatmul.bf16.gmra.mxu0 %v1565
        %v1989 = vpop.f32.mrf.mxu0
        %v1990 = vadd.f32 %v1637, %v1989
        %v1991 = vpop.f32.mrf.mxu0
        %v1992 = vadd.f32 %v1637, %v1991
        %1993 = vdwg.mxu0
        %1994 = vmatpush.bf16.msra.mxu0 %v1877
        %1995 = vmatpush.bf16.msra.mxu0 %v1870
        %1996 = vmatpush.bf16.msra.mxu0 %v1863
        %1997 = vmatpush.bf16.msra.mxu0 %v1856
        %1998 = vmatpush.bf16.msra.mxu0 %v1849
        %1999 = vmatpush.bf16.msra.mxu0 %v1842
        %2000 = vmatpush.bf16.msra.mxu0 %v1835
        %2001 = vmatpush.bf16.msra.mxu0 %v1828
        %2002 = vmatmul.bf16.gmra.mxu0 %v1564
        %v2003 = vpop.f32.mrf.mxu0
        %v2004 = vadd.f32 %v1638, %v2003
        %v2005 = vpop.f32.mrf.mxu0
        %v2006 = vadd.f32 %v1638, %v2005
        %2007 = vmatmul.bf16.gmra.mxu0 %v1565
        %v2008 = vpop.f32.mrf.mxu0
        %v2009 = vadd.f32 %v1638, %v2008
        %v2010 = vpop.f32.mrf.mxu0
        %v2011 = vadd.f32 %v1638, %v2010
        %2012 = vdwg.mxu0
        %2013 = vmatpush.bf16.msra.mxu0 %v1878
        %2014 = vmatpush.bf16.msra.mxu0 %v1871
        %2015 = vmatpush.bf16.msra.mxu0 %v1864
        %2016 = vmatpush.bf16.msra.mxu0 %v1857
        %2017 = vmatpush.bf16.msra.mxu0 %v1850
        %2018 = vmatpush.bf16.msra.mxu0 %v1843
        %2019 = vmatpush.bf16.msra.mxu0 %v1836
        %2020 = vmatpush.bf16.msra.mxu0 %v1829
        %2021 = vmatmul.bf16.gmra.mxu0 %v1564
        %v2022 = vpop.f32.mrf.mxu0
        %v2023 = vadd.f32 %v1639, %v2022
        %v2024 = vpop.f32.mrf.mxu0
        %v2025 = vadd.f32 %v1639, %v2024
        %2026 = vmatmul.bf16.gmra.mxu0 %v1565
        %v2027 = vpop.f32.mrf.mxu0
        %v2028 = vadd.f32 %v1639, %v2027
        %v2029 = vpop.f32.mrf.mxu0
        %v2030 = vadd.f32 %v1639, %v2029
        %2031 = vdwg.mxu0
        %2032 = vmatpush.bf16.msra.mxu0 %v1879
        %2033 = vmatpush.bf16.msra.mxu0 %v1872
        %2034 = vmatpush.bf16.msra.mxu0 %v1865
        %2035 = vmatpush.bf16.msra.mxu0 %v1858
        %2036 = vmatpush.bf16.msra.mxu0 %v1851
        %2037 = vmatpush.bf16.msra.mxu0 %v1844
        %2038 = vmatpush.bf16.msra.mxu0 %v1837
        %2039 = vmatpush.bf16.msra.mxu0 %v1830
        %2040 = vmatmul.bf16.gmra.mxu0 %v1564
        %v2041 = vpop.f32.mrf.mxu0
        %v2042 = vadd.f32 %v1640, %v2041
        %v2043 = vpop.f32.mrf.mxu0
        %v2044 = vadd.f32 %v1640, %v2043
        %2045 = vmatmul.bf16.gmra.mxu0 %v1565
        %v2046 = vpop.f32.mrf.mxu0
        %v2047 = vadd.f32 %v1640, %v2046
        %v2048 = vpop.f32.mrf.mxu0
        %v2049 = vadd.f32 %v1640, %v2048
        %2050 = vdwg.mxu0
        %2051 = vmatpush.bf16.msra.mxu0 %v1880
        %2052 = vmatpush.bf16.msra.mxu0 %v1873
        %2053 = vmatpush.bf16.msra.mxu0 %v1866
        %2054 = vmatpush.bf16.msra.mxu0 %v1859
        %2055 = vmatpush.bf16.msra.mxu0 %v1852
        %2056 = vmatpush.bf16.msra.mxu0 %v1845
        %2057 = vmatpush.bf16.msra.mxu0 %v1838
        %2058 = vmatpush.bf16.msra.mxu0 %v1831
        %2059 = vmatmul.bf16.gmra.mxu0 %v1564
        %v2060 = vpop.f32.mrf.mxu0
        %v2061 = vadd.f32 %v1641, %v2060
        %v2062 = vpop.f32.mrf.mxu0
        %v2063 = vadd.f32 %v1641, %v2062
        %2064 = vmatmul.bf16.gmra.mxu0 %v1565
        %v2065 = vpop.f32.mrf.mxu0
        %v2066 = vadd.f32 %v1641, %v2065
        %v2067 = vpop.f32.mrf.mxu0
        %v2068 = vadd.f32 %v1641, %v2067
        %2069 = vdwg.mxu0
        %v2070 = vxor.u32 %v1947, 2147483648
        %v2071 = vxor.u32 %v1966, 2147483648
        %v2072 = vxor.u32 %v1985, 2147483648
        %v2073 = vxor.u32 %v2004, 2147483648
        %v2074 = vxor.u32 %v2023, 2147483648
        %v2075 = vxor.u32 %v2042, 2147483648
        %v2076 = vxor.u32 %v2061, 2147483648
        %v2077 = vxor.u32 %v1949, 2147483648
        %v2078 = vxor.u32 %v1968, 2147483648
        %v2079 = vxor.u32 %v1987, 2147483648
        %v2080 = vxor.u32 %v2006, 2147483648
        %v2081 = vxor.u32 %v2025, 2147483648
        %v2082 = vxor.u32 %v2044, 2147483648
        %v2083 = vxor.u32 %v2063, 2147483648
        %v2084 = vxor.u32 %v1952, 2147483648
        %v2085 = vxor.u32 %v1971, 2147483648
        %v2086 = vxor.u32 %v1990, 2147483648
        %v2087 = vxor.u32 %v2009, 2147483648
        %v2088 = vxor.u32 %v2028, 2147483648
        %v2089 = vxor.u32 %v2047, 2147483648
        %v2090 = vxor.u32 %v2066, 2147483648
        %v2091 = vxor.u32 %v1954, 2147483648
        %v2092 = vxor.u32 %v1973, 2147483648
        %v2093 = vxor.u32 %v1992, 2147483648
        %v2094 = vxor.u32 %v2011, 2147483648
        %v2095 = vxor.u32 %v2030, 2147483648
        %v2096 = vxor.u32 %v2049, 2147483648
        %v2097 = vxor.u32 %v2068, 2147483648
        %v2098 = vmul.f32 %v2070, 1.442695
        %v2099 = vpow.pop %v2098
        %v2100 = vmul.f32 %v2071, 1.442695
        %v2101 = vpow.pop %v2100
        %v2102 = vmul.f32 %v2072, 1.442695
        %v2103 = vpow.pop %v2102
        %v2104 = vmul.f32 %v2073, 1.442695
        %v2105 = vpow.pop %v2104
        %v2106 = vmul.f32 %v2074, 1.442695
        %v2107 = vpow.pop %v2106
        %v2108 = vmul.f32 %v2075, 1.442695
        %v2109 = vpow.pop %v2108
        %v2110 = vmul.f32 %v2076, 1.442695
        %v2111 = vpow.pop %v2110
        %v2112 = vmul.f32 %v2077, 1.442695
        %v2113 = vpow.pop %v2112
        %v2114 = vmul.f32 %v2078, 1.442695
        %v2115 = vpow.pop %v2114
        %v2116 = vmul.f32 %v2079, 1.442695
        %v2117 = vpow.pop %v2116
        %v2118 = vmul.f32 %v2080, 1.442695
        %v2119 = vpow.pop %v2118
        %v2120 = vmul.f32 %v2081, 1.442695
        %v2121 = vpow.pop %v2120
        %v2122 = vmul.f32 %v2082, 1.442695
        %v2123 = vpow.pop %v2122
        %v2124 = vmul.f32 %v2083, 1.442695
        %v2125 = vpow.pop %v2124
        %v2126 = vmul.f32 %v2084, 1.442695
        %v2127 = vpow.pop %v2126
        %v2128 = vmul.f32 %v2085, 1.442695
        %v2129 = vpow.pop %v2128
        %v2130 = vmul.f32 %v2086, 1.442695
        %v2131 = vpow.pop %v2130
        %v2132 = vmul.f32 %v2087, 1.442695
        %v2133 = vpow.pop %v2132
        %v2134 = vmul.f32 %v2088, 1.442695
        %v2135 = vpow.pop %v2134
        %v2136 = vmul.f32 %v2089, 1.442695
        %v2137 = vpow.pop %v2136
        %v2138 = vmul.f32 %v2090, 1.442695
        %v2139 = vpow.pop %v2138
        %v2140 = vmul.f32 %v2091, 1.442695
        %v2141 = vpow.pop %v2140
        %v2142 = vmul.f32 %v2092, 1.442695
        %v2143 = vpow.pop %v2142
        %v2144 = vmul.f32 %v2093, 1.442695
        %v2145 = vpow.pop %v2144
        %v2146 = vmul.f32 %v2094, 1.442695
        %v2147 = vpow.pop %v2146
        %v2148 = vmul.f32 %v2095, 1.442695
        %v2149 = vpow.pop %v2148
        %v2150 = vmul.f32 %v2096, 1.442695
        %v2151 = vpow.pop %v2150
        %v2152 = vmul.f32 %v2097, 1.442695
        %v2153 = vpow.pop %v2152
        %v2154 = vadd.f32 %v2099, 1.0
        %v2155 = vadd.f32 %v2101, 1.0
        %v2156 = vadd.f32 %v2103, 1.0
        %v2157 = vadd.f32 %v2105, 1.0
        %v2158 = vadd.f32 %v2107, 1.0
        %v2159 = vadd.f32 %v2109, 1.0
        %v2160 = vadd.f32 %v2111, 1.0
        %v2161 = vadd.f32 %v2113, 1.0
        %v2162 = vadd.f32 %v2115, 1.0
        %v2163 = vadd.f32 %v2117, 1.0
        %v2164 = vadd.f32 %v2119, 1.0
        %v2165 = vadd.f32 %v2121, 1.0
        %v2166 = vadd.f32 %v2123, 1.0
        %v2167 = vadd.f32 %v2125, 1.0
        %v2168 = vadd.f32 %v2127, 1.0
        %v2169 = vadd.f32 %v2129, 1.0
        %v2170 = vadd.f32 %v2131, 1.0
        %v2171 = vadd.f32 %v2133, 1.0
        %v2172 = vadd.f32 %v2135, 1.0
        %v2173 = vadd.f32 %v2137, 1.0
        %v2174 = vadd.f32 %v2139, 1.0
        %v2175 = vadd.f32 %v2141, 1.0
        %v2176 = vadd.f32 %v2143, 1.0
        %v2177 = vadd.f32 %v2145, 1.0
        %v2178 = vadd.f32 %v2147, 1.0
        %v2179 = vadd.f32 %v2149, 1.0
        %v2180 = vadd.f32 %v2151, 1.0
        %v2181 = vadd.f32 %v2153, 1.0
        %v2182 = vrcp.pop %v2154
        %v2183 = vmul.f32 %v2154, %v2182
        %v2184 = vsub.f32 1.0, %v2183
        %v2185 = vmul.f32 %v2182, %v2184
        %v2186 = vadd.f32 %v2182, %v2185
        %vm2187 = vweird.f32 %v2154
        %vm2188 = vweird.f32 %v2182
        %vm2189 = vmor %vm2187, %vm2188
        %v2190 = vsel %vm2189, %v2182, %v2186
        %v2191 = vand.u32 2147483647, %v2154
        %vm2192 = vcmp.eq.f32.partialorder %v2191, 8.507059e+37
        %v2193 = vand.u32 %v2154, 2147483648
        %v2194 = vor.u32 1.1754944e-38, %v2193
        %v2195 = vsel %vm2192, %v2194, %v2190
        %v2196 = vmul.f32 1.0, %v2195
        %v2197 = vrcp.pop %v2155
        %v2198 = vmul.f32 %v2155, %v2197
        %v2199 = vsub.f32 1.0, %v2198
        %v2200 = vmul.f32 %v2197, %v2199
        %v2201 = vadd.f32 %v2197, %v2200
        %vm2202 = vweird.f32 %v2155
        %vm2203 = vweird.f32 %v2197
        %vm2204 = vmor %vm2202, %vm2203
        %v2205 = vsel %vm2204, %v2197, %v2201
        %v2206 = vand.u32 2147483647, %v2155
        %vm2207 = vcmp.eq.f32.partialorder %v2206, 8.507059e+37
        %v2208 = vand.u32 %v2155, 2147483648
        %v2209 = vor.u32 1.1754944e-38, %v2208
        %v2210 = vsel %vm2207, %v2209, %v2205
        %v2211 = vmul.f32 1.0, %v2210
        %v2212 = vrcp.pop %v2156
        %v2213 = vmul.f32 %v2156, %v2212
        %v2214 = vsub.f32 1.0, %v2213
        %v2215 = vmul.f32 %v2212, %v2214
        %v2216 = vadd.f32 %v2212, %v2215
        %vm2217 = vweird.f32 %v2156
        %vm2218 = vweird.f32 %v2212
        %vm2219 = vmor %vm2217, %vm2218
        %v2220 = vsel %vm2219, %v2212, %v2216
        %v2221 = vand.u32 2147483647, %v2156
        %vm2222 = vcmp.eq.f32.partialorder %v2221, 8.507059e+37
        %v2223 = vand.u32 %v2156, 2147483648
        %v2224 = vor.u32 1.1754944e-38, %v2223
        %v2225 = vsel %vm2222, %v2224, %v2220
        %v2226 = vmul.f32 1.0, %v2225
        %v2227 = vrcp.pop %v2157
        %v2228 = vmul.f32 %v2157, %v2227
        %v2229 = vsub.f32 1.0, %v2228
        %v2230 = vmul.f32 %v2227, %v2229
        %v2231 = vadd.f32 %v2227, %v2230
        %vm2232 = vweird.f32 %v2157
        %vm2233 = vweird.f32 %v2227
        %vm2234 = vmor %vm2232, %vm2233
        %v2235 = vsel %vm2234, %v2227, %v2231
        %v2236 = vand.u32 2147483647, %v2157
        %vm2237 = vcmp.eq.f32.partialorder %v2236, 8.507059e+37
        %v2238 = vand.u32 %v2157, 2147483648
        %v2239 = vor.u32 1.1754944e-38, %v2238
        %v2240 = vsel %vm2237, %v2239, %v2235
        %v2241 = vmul.f32 1.0, %v2240
        %v2242 = vrcp.pop %v2158
        %v2243 = vmul.f32 %v2158, %v2242
        %v2244 = vsub.f32 1.0, %v2243
        %v2245 = vmul.f32 %v2242, %v2244
        %v2246 = vadd.f32 %v2242, %v2245
        %vm2247 = vweird.f32 %v2158
        %vm2248 = vweird.f32 %v2242
        %vm2249 = vmor %vm2247, %vm2248
        %v2250 = vsel %vm2249, %v2242, %v2246
        %v2251 = vand.u32 2147483647, %v2158
        %vm2252 = vcmp.eq.f32.partialorder %v2251, 8.507059e+37
        %v2253 = vand.u32 %v2158, 2147483648
        %v2254 = vor.u32 1.1754944e-38, %v2253
        %v2255 = vsel %vm2252, %v2254, %v2250
        %v2256 = vmul.f32 1.0, %v2255
        %v2257 = vrcp.pop %v2159
        %v2258 = vmul.f32 %v2159, %v2257
        %v2259 = vsub.f32 1.0, %v2258
        %v2260 = vmul.f32 %v2257, %v2259
        %v2261 = vadd.f32 %v2257, %v2260
        %vm2262 = vweird.f32 %v2159
        %vm2263 = vweird.f32 %v2257
        %vm2264 = vmor %vm2262, %vm2263
        %v2265 = vsel %vm2264, %v2257, %v2261
        %v2266 = vand.u32 2147483647, %v2159
        %vm2267 = vcmp.eq.f32.partialorder %v2266, 8.507059e+37
        %v2268 = vand.u32 %v2159, 2147483648
        %v2269 = vor.u32 1.1754944e-38, %v2268
        %v2270 = vsel %vm2267, %v2269, %v2265
        %v2271 = vmul.f32 1.0, %v2270
        %v2272 = vrcp.pop %v2160
        %v2273 = vmul.f32 %v2160, %v2272
        %v2274 = vsub.f32 1.0, %v2273
        %v2275 = vmul.f32 %v2272, %v2274
        %v2276 = vadd.f32 %v2272, %v2275
        %vm2277 = vweird.f32 %v2160
        %vm2278 = vweird.f32 %v2272
        %vm2279 = vmor %vm2277, %vm2278
        %v2280 = vsel %vm2279, %v2272, %v2276
        %v2281 = vand.u32 2147483647, %v2160
        %vm2282 = vcmp.eq.f32.partialorder %v2281, 8.507059e+37
        %v2283 = vand.u32 %v2160, 2147483648
        %v2284 = vor.u32 1.1754944e-38, %v2283
        %v2285 = vsel %vm2282, %v2284, %v2280
        %v2286 = vmul.f32 1.0, %v2285
        %v2287 = vrcp.pop %v2161
        %v2288 = vmul.f32 %v2161, %v2287
        %v2289 = vsub.f32 1.0, %v2288
        %v2290 = vmul.f32 %v2287, %v2289
        %v2291 = vadd.f32 %v2287, %v2290
        %vm2292 = vweird.f32 %v2161
        %vm2293 = vweird.f32 %v2287
        %vm2294 = vmor %vm2292, %vm2293
        %v2295 = vsel %vm2294, %v2287, %v2291
        %v2296 = vand.u32 2147483647, %v2161
        %vm2297 = vcmp.eq.f32.partialorder %v2296, 8.507059e+37
        %v2298 = vand.u32 %v2161, 2147483648
        %v2299 = vor.u32 1.1754944e-38, %v2298
        %v2300 = vsel %vm2297, %v2299, %v2295
        %v2301 = vmul.f32 1.0, %v2300
        %v2302 = vrcp.pop %v2162
        %v2303 = vmul.f32 %v2162, %v2302
        %v2304 = vsub.f32 1.0, %v2303
        %v2305 = vmul.f32 %v2302, %v2304
        %v2306 = vadd.f32 %v2302, %v2305
        %vm2307 = vweird.f32 %v2162
        %vm2308 = vweird.f32 %v2302
        %vm2309 = vmor %vm2307, %vm2308
        %v2310 = vsel %vm2309, %v2302, %v2306
        %v2311 = vand.u32 2147483647, %v2162
        %vm2312 = vcmp.eq.f32.partialorder %v2311, 8.507059e+37
        %v2313 = vand.u32 %v2162, 2147483648
        %v2314 = vor.u32 1.1754944e-38, %v2313
        %v2315 = vsel %vm2312, %v2314, %v2310
        %v2316 = vmul.f32 1.0, %v2315
        %v2317 = vrcp.pop %v2163
        %v2318 = vmul.f32 %v2163, %v2317
        %v2319 = vsub.f32 1.0, %v2318
        %v2320 = vmul.f32 %v2317, %v2319
        %v2321 = vadd.f32 %v2317, %v2320
        %vm2322 = vweird.f32 %v2163
        %vm2323 = vweird.f32 %v2317
        %vm2324 = vmor %vm2322, %vm2323
        %v2325 = vsel %vm2324, %v2317, %v2321
        %v2326 = vand.u32 2147483647, %v2163
        %vm2327 = vcmp.eq.f32.partialorder %v2326, 8.507059e+37
        %v2328 = vand.u32 %v2163, 2147483648
        %v2329 = vor.u32 1.1754944e-38, %v2328
        %v2330 = vsel %vm2327, %v2329, %v2325
        %v2331 = vmul.f32 1.0, %v2330
        %v2332 = vrcp.pop %v2164
        %v2333 = vmul.f32 %v2164, %v2332
        %v2334 = vsub.f32 1.0, %v2333
        %v2335 = vmul.f32 %v2332, %v2334
        %v2336 = vadd.f32 %v2332, %v2335
        %vm2337 = vweird.f32 %v2164
        %vm2338 = vweird.f32 %v2332
        %vm2339 = vmor %vm2337, %vm2338
        %v2340 = vsel %vm2339, %v2332, %v2336
        %v2341 = vand.u32 2147483647, %v2164
        %vm2342 = vcmp.eq.f32.partialorder %v2341, 8.507059e+37
        %v2343 = vand.u32 %v2164, 2147483648
        %v2344 = vor.u32 1.1754944e-38, %v2343
        %v2345 = vsel %vm2342, %v2344, %v2340
        %v2346 = vmul.f32 1.0, %v2345
        %v2347 = vrcp.pop %v2165
        %v2348 = vmul.f32 %v2165, %v2347
        %v2349 = vsub.f32 1.0, %v2348
        %v2350 = vmul.f32 %v2347, %v2349
        %v2351 = vadd.f32 %v2347, %v2350
        %vm2352 = vweird.f32 %v2165
        %vm2353 = vweird.f32 %v2347
        %vm2354 = vmor %vm2352, %vm2353
        %v2355 = vsel %vm2354, %v2347, %v2351
        %v2356 = vand.u32 2147483647, %v2165
        %vm2357 = vcmp.eq.f32.partialorder %v2356, 8.507059e+37
        %v2358 = vand.u32 %v2165, 2147483648
        %v2359 = vor.u32 1.1754944e-38, %v2358
        %v2360 = vsel %vm2357, %v2359, %v2355
        %v2361 = vmul.f32 1.0, %v2360
        %v2362 = vrcp.pop %v2166
        %v2363 = vmul.f32 %v2166, %v2362
        %v2364 = vsub.f32 1.0, %v2363
        %v2365 = vmul.f32 %v2362, %v2364
        %v2366 = vadd.f32 %v2362, %v2365
        %vm2367 = vweird.f32 %v2166
        %vm2368 = vweird.f32 %v2362
        %vm2369 = vmor %vm2367, %vm2368
        %v2370 = vsel %vm2369, %v2362, %v2366
        %v2371 = vand.u32 2147483647, %v2166
        %vm2372 = vcmp.eq.f32.partialorder %v2371, 8.507059e+37
        %v2373 = vand.u32 %v2166, 2147483648
        %v2374 = vor.u32 1.1754944e-38, %v2373
        %v2375 = vsel %vm2372, %v2374, %v2370
        %v2376 = vmul.f32 1.0, %v2375
        %v2377 = vrcp.pop %v2167
        %v2378 = vmul.f32 %v2167, %v2377
        %v2379 = vsub.f32 1.0, %v2378
        %v2380 = vmul.f32 %v2377, %v2379
        %v2381 = vadd.f32 %v2377, %v2380
        %vm2382 = vweird.f32 %v2167
        %vm2383 = vweird.f32 %v2377
        %vm2384 = vmor %vm2382, %vm2383
        %v2385 = vsel %vm2384, %v2377, %v2381
        %v2386 = vand.u32 2147483647, %v2167
        %vm2387 = vcmp.eq.f32.partialorder %v2386, 8.507059e+37
        %v2388 = vand.u32 %v2167, 2147483648
        %v2389 = vor.u32 1.1754944e-38, %v2388
        %v2390 = vsel %vm2387, %v2389, %v2385
        %v2391 = vmul.f32 1.0, %v2390
        %v2392 = vrcp.pop %v2168
        %v2393 = vmul.f32 %v2168, %v2392
        %v2394 = vsub.f32 1.0, %v2393
        %v2395 = vmul.f32 %v2392, %v2394
        %v2396 = vadd.f32 %v2392, %v2395
        %vm2397 = vweird.f32 %v2168
        %vm2398 = vweird.f32 %v2392
        %vm2399 = vmor %vm2397, %vm2398
        %v2400 = vsel %vm2399, %v2392, %v2396
        %v2401 = vand.u32 2147483647, %v2168
        %vm2402 = vcmp.eq.f32.partialorder %v2401, 8.507059e+37
        %v2403 = vand.u32 %v2168, 2147483648
        %v2404 = vor.u32 1.1754944e-38, %v2403
        %v2405 = vsel %vm2402, %v2404, %v2400
        %v2406 = vmul.f32 1.0, %v2405
        %v2407 = vrcp.pop %v2169
        %v2408 = vmul.f32 %v2169, %v2407
        %v2409 = vsub.f32 1.0, %v2408
        %v2410 = vmul.f32 %v2407, %v2409
        %v2411 = vadd.f32 %v2407, %v2410
        %vm2412 = vweird.f32 %v2169
        %vm2413 = vweird.f32 %v2407
        %vm2414 = vmor %vm2412, %vm2413
        %v2415 = vsel %vm2414, %v2407, %v2411
        %v2416 = vand.u32 2147483647, %v2169
        %vm2417 = vcmp.eq.f32.partialorder %v2416, 8.507059e+37
        %v2418 = vand.u32 %v2169, 2147483648
        %v2419 = vor.u32 1.1754944e-38, %v2418
        %v2420 = vsel %vm2417, %v2419, %v2415
        %v2421 = vmul.f32 1.0, %v2420
        %v2422 = vrcp.pop %v2170
        %v2423 = vmul.f32 %v2170, %v2422
        %v2424 = vsub.f32 1.0, %v2423
        %v2425 = vmul.f32 %v2422, %v2424
        %v2426 = vadd.f32 %v2422, %v2425
        %vm2427 = vweird.f32 %v2170
        %vm2428 = vweird.f32 %v2422
        %vm2429 = vmor %vm2427, %vm2428
        %v2430 = vsel %vm2429, %v2422, %v2426
        %v2431 = vand.u32 2147483647, %v2170
        %vm2432 = vcmp.eq.f32.partialorder %v2431, 8.507059e+37
        %v2433 = vand.u32 %v2170, 2147483648
        %v2434 = vor.u32 1.1754944e-38, %v2433
        %v2435 = vsel %vm2432, %v2434, %v2430
        %v2436 = vmul.f32 1.0, %v2435
        %v2437 = vrcp.pop %v2171
        %v2438 = vmul.f32 %v2171, %v2437
        %v2439 = vsub.f32 1.0, %v2438
        %v2440 = vmul.f32 %v2437, %v2439
        %v2441 = vadd.f32 %v2437, %v2440
        %vm2442 = vweird.f32 %v2171
        %vm2443 = vweird.f32 %v2437
        %vm2444 = vmor %vm2442, %vm2443
        %v2445 = vsel %vm2444, %v2437, %v2441
        %v2446 = vand.u32 2147483647, %v2171
        %vm2447 = vcmp.eq.f32.partialorder %v2446, 8.507059e+37
        %v2448 = vand.u32 %v2171, 2147483648
        %v2449 = vor.u32 1.1754944e-38, %v2448
        %v2450 = vsel %vm2447, %v2449, %v2445
        %v2451 = vmul.f32 1.0, %v2450
        %v2452 = vrcp.pop %v2172
        %v2453 = vmul.f32 %v2172, %v2452
        %v2454 = vsub.f32 1.0, %v2453
        %v2455 = vmul.f32 %v2452, %v2454
        %v2456 = vadd.f32 %v2452, %v2455
        %vm2457 = vweird.f32 %v2172
        %vm2458 = vweird.f32 %v2452
        %vm2459 = vmor %vm2457, %vm2458
        %v2460 = vsel %vm2459, %v2452, %v2456
        %v2461 = vand.u32 2147483647, %v2172
        %vm2462 = vcmp.eq.f32.partialorder %v2461, 8.507059e+37
        %v2463 = vand.u32 %v2172, 2147483648
        %v2464 = vor.u32 1.1754944e-38, %v2463
        %v2465 = vsel %vm2462, %v2464, %v2460
        %v2466 = vmul.f32 1.0, %v2465
        %v2467 = vrcp.pop %v2173
        %v2468 = vmul.f32 %v2173, %v2467
        %v2469 = vsub.f32 1.0, %v2468
        %v2470 = vmul.f32 %v2467, %v2469
        %v2471 = vadd.f32 %v2467, %v2470
        %vm2472 = vweird.f32 %v2173
        %vm2473 = vweird.f32 %v2467
        %vm2474 = vmor %vm2472, %vm2473
        %v2475 = vsel %vm2474, %v2467, %v2471
        %v2476 = vand.u32 2147483647, %v2173
        %vm2477 = vcmp.eq.f32.partialorder %v2476, 8.507059e+37
        %v2478 = vand.u32 %v2173, 2147483648
        %v2479 = vor.u32 1.1754944e-38, %v2478
        %v2480 = vsel %vm2477, %v2479, %v2475
        %v2481 = vmul.f32 1.0, %v2480
        %v2482 = vrcp.pop %v2174
        %v2483 = vmul.f32 %v2174, %v2482
        %v2484 = vsub.f32 1.0, %v2483
        %v2485 = vmul.f32 %v2482, %v2484
        %v2486 = vadd.f32 %v2482, %v2485
        %vm2487 = vweird.f32 %v2174
        %vm2488 = vweird.f32 %v2482
        %vm2489 = vmor %vm2487, %vm2488
        %v2490 = vsel %vm2489, %v2482, %v2486
        %v2491 = vand.u32 2147483647, %v2174
        %vm2492 = vcmp.eq.f32.partialorder %v2491, 8.507059e+37
        %v2493 = vand.u32 %v2174, 2147483648
        %v2494 = vor.u32 1.1754944e-38, %v2493
        %v2495 = vsel %vm2492, %v2494, %v2490
        %v2496 = vmul.f32 1.0, %v2495
        %v2497 = vrcp.pop %v2175
        %v2498 = vmul.f32 %v2175, %v2497
        %v2499 = vsub.f32 1.0, %v2498
        %v2500 = vmul.f32 %v2497, %v2499
        %v2501 = vadd.f32 %v2497, %v2500
        %vm2502 = vweird.f32 %v2175
        %vm2503 = vweird.f32 %v2497
        %vm2504 = vmor %vm2502, %vm2503
        %v2505 = vsel %vm2504, %v2497, %v2501
        %v2506 = vand.u32 2147483647, %v2175
        %vm2507 = vcmp.eq.f32.partialorder %v2506, 8.507059e+37
        %v2508 = vand.u32 %v2175, 2147483648
        %v2509 = vor.u32 1.1754944e-38, %v2508
        %v2510 = vsel %vm2507, %v2509, %v2505
        %v2511 = vmul.f32 1.0, %v2510
        %v2512 = vrcp.pop %v2176
        %v2513 = vmul.f32 %v2176, %v2512
        %v2514 = vsub.f32 1.0, %v2513
        %v2515 = vmul.f32 %v2512, %v2514
        %v2516 = vadd.f32 %v2512, %v2515
        %vm2517 = vweird.f32 %v2176
        %vm2518 = vweird.f32 %v2512
        %vm2519 = vmor %vm2517, %vm2518
        %v2520 = vsel %vm2519, %v2512, %v2516
        %v2521 = vand.u32 2147483647, %v2176
        %vm2522 = vcmp.eq.f32.partialorder %v2521, 8.507059e+37
        %v2523 = vand.u32 %v2176, 2147483648
        %v2524 = vor.u32 1.1754944e-38, %v2523
        %v2525 = vsel %vm2522, %v2524, %v2520
        %v2526 = vmul.f32 1.0, %v2525
        %v2527 = vrcp.pop %v2177
        %v2528 = vmul.f32 %v2177, %v2527
        %v2529 = vsub.f32 1.0, %v2528
        %v2530 = vmul.f32 %v2527, %v2529
        %v2531 = vadd.f32 %v2527, %v2530
        %vm2532 = vweird.f32 %v2177
        %vm2533 = vweird.f32 %v2527
        %vm2534 = vmor %vm2532, %vm2533
        %v2535 = vsel %vm2534, %v2527, %v2531
        %v2536 = vand.u32 2147483647, %v2177
        %vm2537 = vcmp.eq.f32.partialorder %v2536, 8.507059e+37
        %v2538 = vand.u32 %v2177, 2147483648
        %v2539 = vor.u32 1.1754944e-38, %v2538
        %v2540 = vsel %vm2537, %v2539, %v2535
        %v2541 = vmul.f32 1.0, %v2540
        %v2542 = vrcp.pop %v2178
        %v2543 = vmul.f32 %v2178, %v2542
        %v2544 = vsub.f32 1.0, %v2543
        %v2545 = vmul.f32 %v2542, %v2544
        %v2546 = vadd.f32 %v2542, %v2545
        %vm2547 = vweird.f32 %v2178
        %vm2548 = vweird.f32 %v2542
        %vm2549 = vmor %vm2547, %vm2548
        %v2550 = vsel %vm2549, %v2542, %v2546
        %v2551 = vand.u32 2147483647, %v2178
        %vm2552 = vcmp.eq.f32.partialorder %v2551, 8.507059e+37
        %v2553 = vand.u32 %v2178, 2147483648
        %v2554 = vor.u32 1.1754944e-38, %v2553
        %v2555 = vsel %vm2552, %v2554, %v2550
        %v2556 = vmul.f32 1.0, %v2555
        %v2557 = vrcp.pop %v2179
        %v2558 = vmul.f32 %v2179, %v2557
        %v2559 = vsub.f32 1.0, %v2558
        %v2560 = vmul.f32 %v2557, %v2559
        %v2561 = vadd.f32 %v2557, %v2560
        %vm2562 = vweird.f32 %v2179
        %vm2563 = vweird.f32 %v2557
        %vm2564 = vmor %vm2562, %vm2563
        %v2565 = vsel %vm2564, %v2557, %v2561
        %v2566 = vand.u32 2147483647, %v2179
        %vm2567 = vcmp.eq.f32.partialorder %v2566, 8.507059e+37
        %v2568 = vand.u32 %v2179, 2147483648
        %v2569 = vor.u32 1.1754944e-38, %v2568
        %v2570 = vsel %vm2567, %v2569, %v2565
        %v2571 = vmul.f32 1.0, %v2570
        %v2572 = vrcp.pop %v2180
        %v2573 = vmul.f32 %v2180, %v2572
        %v2574 = vsub.f32 1.0, %v2573
        %v2575 = vmul.f32 %v2572, %v2574
        %v2576 = vadd.f32 %v2572, %v2575
        %vm2577 = vweird.f32 %v2180
        %vm2578 = vweird.f32 %v2572
        %vm2579 = vmor %vm2577, %vm2578
        %v2580 = vsel %vm2579, %v2572, %v2576
        %v2581 = vand.u32 2147483647, %v2180
        %vm2582 = vcmp.eq.f32.partialorder %v2581, 8.507059e+37
        %v2583 = vand.u32 %v2180, 2147483648
        %v2584 = vor.u32 1.1754944e-38, %v2583
        %v2585 = vsel %vm2582, %v2584, %v2580
        %v2586 = vmul.f32 1.0, %v2585
        %v2587 = vrcp.pop %v2181
        %v2588 = vmul.f32 %v2181, %v2587
        %v2589 = vsub.f32 1.0, %v2588
        %v2590 = vmul.f32 %v2587, %v2589
        %v2591 = vadd.f32 %v2587, %v2590
        %vm2592 = vweird.f32 %v2181
        %vm2593 = vweird.f32 %v2587
        %vm2594 = vmor %vm2592, %vm2593
        %v2595 = vsel %vm2594, %v2587, %v2591
        %v2596 = vand.u32 2147483647, %v2181
        %vm2597 = vcmp.eq.f32.partialorder %v2596, 8.507059e+37
        %v2598 = vand.u32 %v2181, 2147483648
        %v2599 = vor.u32 1.1754944e-38, %v2598
        %v2600 = vsel %vm2597, %v2599, %v2595
        %v2601 = vmul.f32 1.0, %v2600
        %v2602 = vpack.c.bf16 %v2211, %v2196
        %v2603 = vpack.c.bf16 %v2241, %v2226
        %v2604 = vpack.c.bf16 %v2271, %v2256
        %v2605 = vpack.c.bf16 %v2286, %v2286
        %v2606 = vpack.c.bf16 %v2316, %v2301
        %v2607 = vpack.c.bf16 %v2346, %v2331
        %v2608 = vpack.c.bf16 %v2376, %v2361
        %v2609 = vpack.c.bf16 %v2391, %v2391
        %v2610 = vpack.c.bf16 %v2421, %v2406
        %v2611 = vpack.c.bf16 %v2451, %v2436
        %v2612 = vpack.c.bf16 %v2481, %v2466
        %v2613 = vpack.c.bf16 %v2496, %v2496
        %v2614 = vpack.c.bf16 %v2526, %v2511
        %v2615 = vpack.c.bf16 %v2556, %v2541
        %v2616 = vpack.c.bf16 %v2586, %v2571
        %v2617 = vpack.c.bf16 %v2601, %v2601
        %2618 = vst [vmem:[%s262] sm:$0xff] %v2602
        %2619 = vst [vmem:[%s262 + $0x8] sm:$0xff] %v2603
        %2620 = vst [vmem:[%s262 + $0x10] sm:$0xff] %v2604
        %vm2621 = vcmask 125952
        %2622 = vst.msk [vmem:[%s262 + $0x18] sm:$0xf] %vm2621, %v2605
        %2623 = vst [vmem:[%s262 + $0x1c] sm:$0xff] %v2606
        %2624 = vst [vmem:[%s262 + $0x24] sm:$0xff] %v2607
        %2625 = vst [vmem:[%s262 + $0x2c] sm:$0xff] %v2608
        %2626 = vst.msk [vmem:[%s262 + $0x34] sm:$0xf] %vm2621, %v2609
        %2627 = vst [vmem:[%s262 + $0x38] sm:$0xff] %v2610
        %2628 = vst [vmem:[%s262 + $0x40] sm:$0xff] %v2611
        %2629 = vst [vmem:[%s262 + $0x48] sm:$0xff] %v2612
        %2630 = vst.msk [vmem:[%s262 + $0x50] sm:$0xf] %vm2621, %v2613
        %2631 = vst [vmem:[%s262 + $0x54] sm:$0xff] %v2614
        %2632 = vst [vmem:[%s262 + $0x5c] sm:$0xff] %v2615
        %2633 = vst [vmem:[%s262 + $0x64] sm:$0xff] %v2616
        %2634 = vst.msk [vmem:[%s262 + $0x6c] sm:$0xf] %vm2621, %v2617
        %s2635 = sand.u32 %s141, 1
        %s2636 = scalar_lea.sflag [#allocation4], %s2635
        %s2637 = sand.u32 %s141, 1
        %s2638 = smul.addr %s2637, 112
        %s2639 = scalar_lea.vmem [#allocation7], %s2638
        // Predicated region
        $region49: #{tpu_custom_call.1} parent=39 // pred_check
          %p2640 = pneg %p151
        $region50: #{tpu_custom_call.1} parent=39 // pred_check_branch
          %2642 = sbr.rel (%p2640) target = $region52
        $region51: #{tpu_custom_call.1} parent=39 // pred_region
          %s2643 = smul.u32 4, %s23
          %2645 = vsyncadd %s2636, 0
          %s2646 = smul.addr %s2643, 7
          %s2647 = smul.addr %s2646, 4
          %s2648 = scalar_lea.hbm %s5, %s2647
          %s2649 = sshll.u32 %s2639, 4
          %s2650 = int_to_ptr.vmem [resolvable:$true] %s2649
          %s2651 = sshll.u32 %s2648, 4
          %s2652 = int_to_ptr.hbm [resolvable:$true] %s2651
          %2657 = dma.vmem_to_hbm [thread:$0]  %s2650, 1792, %s2652, %s2636, 448, 448, 28
        $region52: #{tpu_custom_call.1} parent=39 // pred_fallthru
          _
      $region40: #{tpu_custom_call.1} parent=5 // pred_fallthru
        _
      %p2658 = scmp.le.s32.totalorder 2, %s18
      // Predicated region
      $region53: #{tpu_custom_call.1} parent=5 // pred_check
        %p2659 = pneg %p2658
      $region54: #{tpu_custom_call.1} parent=5 // pred_check_branch
        %2661 = sbr.rel (%p2659) target = $region56
      $region55: #{tpu_custom_call.1} parent=5 // pred_region
        %s2662 = ssub.s32 %s18, 2
        // Predicated region
        $region57: #{tpu_custom_call.1} parent=55 // pred_check
          %p2663 = pneg %p157
        $region58: #{tpu_custom_call.1} parent=55 // pred_check_branch
          %2665 = sbr.rel (%p2663) target = $region60
        $region59: #{tpu_custom_call.1} parent=55 // pred_region
          %s2666 = sand.u32 %s142, 1
          %s2667 = scalar_lea.sflag [#allocation4], %s2666
          %s2668 = sand.u32 %s142, 1
          %s2669 = smul.addr %s2668, 112
          %s2670 = scalar_lea.vmem [#allocation7], %s2669
          %2672 = dma.done %s2667, 1792
        $region60: #{tpu_custom_call.1} parent=55 // pred_fallthru
          _
      $region56: #{tpu_custom_call.1} parent=5 // pred_fallthru
        _
    $region6: #{tpu_custom_call.1} parent=1 // loop_footer
      %s22 = sadd.s32 1, %s18
    $region7: #{tpu_custom_call.1} parent=1 // loop_footer_branch
      %17 = sbr.rel target = $region3
    $region8: #{tpu_custom_call.1} parent=1 // loop_exit
      _
    %2673 = vsyncpa [#allocation3], 1
    %s2674 = scalar_lea.sflag [#allocation3], 1
    %2675 = vsyncpa %s2674, 1
    %2676 = vsyncpa [#allocation6], 1
    %2677 = vsyncpa [#allocation4], 1
    %s2678 = scalar_lea.sflag [#allocation4], 1
    %2679 = vsyncpa %s2678, 1

</llo_original>
